<compile_context>
chip_gen: v6e
topology: v6e:2x2x1
jax: 0.10.0
libtpu: 0.0.40
codegen_flags: <defaults>
</compile_context>

<pallas_src>
import functools

import jax
import jax.numpy as jnp
from jax.experimental import pallas as pl
from jax.experimental.pallas import tpu as pltpu


PARAM_ORDER = ["wq", "bq", "wk", "bk", "wv", "bv", "wo", "bo",
               "g1", "bt1", "w1", "bf1", "w2", "bf2", "g2", "bt2"]


# ----------------------------- Pallas kernel ---------------------------------

def _layernorm(x, gamma, beta, eps=1e-5):
    mean = jnp.mean(x, axis=-1, keepdims=True)
    var = jnp.mean((x - mean) ** 2, axis=-1, keepdims=True)
    return (x - mean) * jax.lax.rsqrt(var + eps) * gamma + beta


def fused_encoder_kernel(x_ref,
                         wq_ref, bq_ref, wk_ref, bk_ref, wv_ref, bv_ref,
                         wo_ref, bo_ref,
                         g1_ref, b1_ref,
                         w1_ref, f1_ref, w2_ref, f2_ref,
                         g2_ref, b2_ref,
                         o_ref,
                         *, batch, seq_len, num_head, head_dim):
    """One encoder layer per grid step; activation carried in o_ref across steps."""
    f32 = jnp.float32
    bf16 = jnp.bfloat16
    d_model = num_head * head_dim
    n_rows = batch * seq_len

    # Layer 0: seed the resident activation (output block revisited every step).
    @pl.when(pl.program_id(0) == 0)
    def _():
        o_ref[...] = x_ref[...]

    x = o_ref[...]                       # (B*L, D) f32 activation of this layer
    xb = x.astype(bf16)                  # bf16 MXU operand, f32 accumulate below

    # --- QKV projections (1/sqrt(head_dim) already folded into wq/bq) ---
    q = jnp.dot(xb, wq_ref[0], preferred_element_type=f32) + bq_ref[0]
    k = jnp.dot(xb, wk_ref[0], preferred_element_type=f32) + bk_ref[0]
    v = jnp.dot(xb, wv_ref[0], preferred_element_type=f32) + bv_ref[0]

    q3 = q.astype(bf16).reshape(batch, seq_len, d_model)
    k3 = k.astype(bf16).reshape(batch, seq_len, d_model)
    v3 = v.astype(bf16).reshape(batch, seq_len, d_model)

    wo_all = wo_ref[0]                   # (H, head_dim, D) bf16

    # --- multi-head self attention: B-batched per head, out-proj accumulated ---
    acc = jnp.zeros((n_rows, d_model), f32)
    for h in range(num_head):            # static unrolled; small H
        lo = h * head_dim
        qh = q3[:, :, lo:lo + head_dim]                          # (B, L, hd)
        kh = k3[:, :, lo:lo + head_dim]
        vh = v3[:, :, lo:lo + head_dim]
        s = jnp.einsum("bqd,bkd->bqk", qh, kh,
                       preferred_element_type=f32)               # (B, L, L) f32
        s = s - jnp.max(s, axis=-1, keepdims=True)
        p = jnp.exp(s)
        p = p * pl.reciprocal(jnp.sum(p, axis=-1, keepdims=True), approx=True)
        oh = jnp.einsum("bqk,bkd->bqd", p.astype(bf16), vh,
                        preferred_element_type=f32)              # (B, L, hd)
        oh2 = oh.reshape(n_rows, head_dim).astype(bf16)
        acc = acc + jnp.dot(oh2, wo_all[h], preferred_element_type=f32)
    attn = acc + bo_ref[0]

    # --- residual + LayerNorm 1 (dropout == identity in eval) ---
    y = _layernorm(x + attn, g1_ref[0], b1_ref[0])

    # --- feed-forward ---
    hidden = jnp.maximum(
        jnp.dot(y.astype(bf16), w1_ref[0], preferred_element_type=f32) + f1_ref[0],
        0.0)
    z = jnp.dot(hidden.astype(bf16), w2_ref[0], preferred_element_type=f32) + f2_ref[0]

    # --- residual + LayerNorm 2 -> becomes next layer's input (carried in VMEM) ---
    o_ref[...] = _layernorm(y + z, g2_ref[0], b2_ref[0]).astype(o_ref.dtype)


# --------------------------- parameter preparation ----------------------------

def stack_layer_params(layer_params, num_head, mxu_dtype=jnp.bfloat16):
    """Stack per-layer params along a leading layer axis; one-time transforms:
    cast matmul weights to bf16, fold 1/sqrt(head_dim) into wq/bq, split wo per head."""
    D = layer_params[0]["wq"].shape[0]
    hd = D // num_head
    scale = float(hd) ** -0.5

    def stk(name, fn):
        return jnp.stack([fn(p[name]) for p in layer_params])

    return {
        "wq": stk("wq", lambda w: (w * scale).astype(mxu_dtype)),
        "bq": stk("bq", lambda b: (b * scale).reshape(1, D)),
        "wk": stk("wk", lambda w: w.astype(mxu_dtype)),
        "bk": stk("bk", lambda b: b.reshape(1, D)),
        "wv": stk("wv", lambda w: w.astype(mxu_dtype)),
        "bv": stk("bv", lambda b: b.reshape(1, D)),
        "wo": stk("wo", lambda w: w.reshape(num_head, hd, D).astype(mxu_dtype)),
        "bo": stk("bo", lambda b: b.reshape(1, D)),
        "g1": stk("g1", lambda g: g.reshape(1, D)),
        "bt1": stk("bt1", lambda b: b.reshape(1, D)),
        "w1": stk("w1", lambda w: w.astype(mxu_dtype)),
        "bf1": stk("bf1", lambda b: b.reshape(1, -1)),
        "w2": stk("w2", lambda w: w.astype(mxu_dtype)),
        "bf2": stk("bf2", lambda b: b.reshape(1, D)),
        "g2": stk("g2", lambda g: g.reshape(1, D)),
        "bt2": stk("bt2", lambda b: b.reshape(1, D)),
    }


# --------------------------------- wrapper ------------------------------------

def transformer_encoder(x, layer_params, num_head):
    B, L, D = x.shape
    NL = len(layer_params)
    head_dim = D // num_head
    Dff = layer_params[0]["w1"].shape[1]
    N = B * L

    stacked = stack_layer_params(layer_params, num_head)

    kernel = functools.partial(
        fused_encoder_kernel,
        batch=B, seq_len=L, num_head=num_head, head_dim=head_dim)

    def wspec(shape):
        nd = len(shape)
        return pl.BlockSpec((1,) + shape, lambda l, _nd=nd: (l,) + (0,) * _nd)

    in_specs = [
        pl.BlockSpec((N, D), lambda l: (0, 0)),            # x (resident, fetched once)
        wspec((D, D)), wspec((1, D)),                      # wq (pre-scaled), bq
        wspec((D, D)), wspec((1, D)),                      # wk, bk
        wspec((D, D)), wspec((1, D)),                      # wv, bv
        wspec((num_head, head_dim, D)), wspec((1, D)),     # wo (split per head), bo
        wspec((1, D)), wspec((1, D)),                      # norm1 gamma/beta
        wspec((D, Dff)), wspec((1, Dff)),                  # linear1
        wspec((Dff, D)), wspec((1, D)),                    # linear2
        wspec((1, D)), wspec((1, D)),                      # norm2 gamma/beta
    ]

    out = pl.pallas_call(
        kernel,
        out_shape=jax.ShapeDtypeStruct((N, D), x.dtype),
        grid_spec=pltpu.PrefetchScalarGridSpec(
            num_scalar_prefetch=0,
            grid=(NL,),                                    # sequential over layers
            in_specs=in_specs,
            # Same block every iteration -> output stays resident in VMEM and acts
            # as the activation carry; written to HBM only after the last layer.
            out_specs=pl.BlockSpec((N, D), lambda l: (0, 0)),
        ),
        compiler_params=pltpu.CompilerParams(
            dimension_semantics=("arbitrary",),            # layers are sequential
        ),
    )(x.reshape(N, D), *[stacked[k] for k in PARAM_ORDER])

    return out.reshape(B, L, D)


# ----------------------------- parameter init --------------------------------

def xavier_uniform(key, fan_in, fan_out, dtype=jnp.float32):
    limit = (6.0 / (fan_in + fan_out)) ** 0.5
    # stored as (in, out) — same distribution as xavier on the (out, in) matrix.
    return jax.random.uniform(key, (fan_in, fan_out), dtype, -limit, limit)


def init_layer_params(key, d_model, dim_feedforward, dtype=jnp.float32):
    ks = jax.random.split(key, 12)
    D, F = d_model, dim_feedforward
    return {
        "wq": xavier_uniform(ks[0], D, D), "bq": jnp.zeros((1, D), dtype),
        "wk": xavier_uniform(ks[1], D, D), "bk": jnp.zeros((1, D), dtype),
        "wv": xavier_uniform(ks[2], D, D), "bv": jnp.zeros((1, D), dtype),
        "wo": xavier_uniform(ks[3], D, D),
        "bo": 0.01 * jax.random.normal(ks[4], (1, D), dtype),
        "g1": jnp.ones((1, D), dtype), "bt1": jnp.zeros((1, D), dtype),
        "w1": xavier_uniform(ks[5], D, F),
        "bf1": 0.01 * jax.random.normal(ks[6], (1, F), dtype),
        "w2": xavier_uniform(ks[7], F, D),
        "bf2": 0.01 * jax.random.normal(ks[8], (1, D), dtype),
        "g2": jnp.ones((1, D), dtype), "bt2": jnp.zeros((1, D), dtype),
    }


# ----------------------------- pure-JAX reference ----------------------------

def _ref_layer(x, p, num_head):
    B, L, D = x.shape
    hd = D // num_head
    q = x @ p["wq"] + p["bq"]
    k = x @ p["wk"] + p["bk"]
    v = x @ p["wv"] + p["bv"]
    q = q * (float(hd) ** -0.5)

    def split(t):  # (B, L, D) -> (B, H, L, hd)
        return t.reshape(B, L, num_head, hd).transpose(0, 2, 1, 3)

    qh, kh, vh = split(q), split(k), split(v)
    s = jnp.einsum("bhqd,bhkd->bhqk", qh, kh)
    pw = jax.nn.softmax(s, axis=-1)
    o = jnp.einsum("bhqk,bhkd->bhqd", pw, vh)
    o = o.transpose(0, 2, 1, 3).reshape(B, L, D)
    attn = o @ p["wo"] + p["bo"]

    def ln(t, g, b, eps=1e-5):
        m = t.mean(-1, keepdims=True)
        var = ((t - m) ** 2).mean(-1, keepdims=True)
        return (t - m) / jnp.sqrt(var + eps) * g + b

    y = ln(x + attn, p["g1"], p["bt1"])
    h = jnp.maximum(y @ p["w1"] + p["bf1"], 0.0)
    z = h @ p["w2"] + p["bf2"]
    return ln(y + z, p["g2"], p["bt2"])


def _ref_encoder(x, layer_params, num_head):
    out = x
    for p in layer_params:
        out = _ref_layer(out, p, num_head)
    return out


# ----------------------------------- main -------------------------------------

if __name__ == "__main__":
    # config: d_model=32, num_head=4, dim_feedforward=64, num_encoder_layers=2
    B, L, D, H, FF, NLAYERS = 2, 8, 32, 4, 64, 2

    key = jax.random.PRNGKey(0)
    kx, *kls = jax.random.split(key, 1 + NLAYERS)
    x = jax.random.normal(kx, (B, L, D), jnp.float32)
    layer_params = [init_layer_params(k, D, FF) for k in kls]

    out = transformer_encoder(x, layer_params, H)
    out = jax.block_until_ready(out)

    ref = _ref_encoder(x, layer_params, H)
    assert out.shape == (B, L, D)
    max_err = float(jnp.max(jnp.abs(out - ref)))
    # Tolerance accounts for bf16 MXU operands (f32 accumulation) vs f32 reference.
    assert jnp.allclose(out, ref, rtol=2e-2, atol=1e-1), \
        f"mismatch vs pure-JAX reference (max abs err {max_err})"

    print("KERNEL_OK")
</pallas_src>

<mosaic_0001>
module attributes {stable_mosaic.version = 11 : i64} {
  func.func @fused_encoder_kernel(%arg0: i32, %arg1: memref<16x32xf32, #tpu.memory_space<vmem>>, %arg2: memref<1x32x32xbf16, #tpu.memory_space<vmem>>, %arg3: memref<1x1x32xf32, #tpu.memory_space<vmem>>, %arg4: memref<1x32x32xbf16, #tpu.memory_space<vmem>>, %arg5: memref<1x1x32xf32, #tpu.memory_space<vmem>>, %arg6: memref<1x32x32xbf16, #tpu.memory_space<vmem>>, %arg7: memref<1x1x32xf32, #tpu.memory_space<vmem>>, %arg8: memref<1x4x8x32xbf16, #tpu.memory_space<vmem>>, %arg9: memref<1x1x32xf32, #tpu.memory_space<vmem>>, %arg10: memref<1x1x32xf32, #tpu.memory_space<vmem>>, %arg11: memref<1x1x32xf32, #tpu.memory_space<vmem>>, %arg12: memref<1x32x64xbf16, #tpu.memory_space<vmem>>, %arg13: memref<1x1x64xf32, #tpu.memory_space<vmem>>, %arg14: memref<1x64x32xbf16, #tpu.memory_space<vmem>>, %arg15: memref<1x1x32xf32, #tpu.memory_space<vmem>>, %arg16: memref<1x1x32xf32, #tpu.memory_space<vmem>>, %arg17: memref<1x1x32xf32, #tpu.memory_space<vmem>>, %arg18: memref<16x32xf32, #tpu.memory_space<vmem>>) attributes {dimension_semantics = [#tpu.dimension_semantics<arbitrary>], iteration_bounds = array<i64: 2>, scalar_prefetch = 0 : i64, scratch_operands = 0 : i64, tpu.core_type = #tpu.core_type<tc>, window_params = [{pipeline_mode = #tpu.pipeline_mode<synchronous>, transform_indices = @transform_0, window_bounds = array<i64: 16, 32>}, {transform_indices = @transform_1, window_bounds = array<i64: 1, 32, 32>}, {transform_indices = @transform_2, window_bounds = array<i64: 1, 1, 32>}, {transform_indices = @transform_3, window_bounds = array<i64: 1, 32, 32>}, {transform_indices = @transform_4, window_bounds = array<i64: 1, 1, 32>}, {transform_indices = @transform_5, window_bounds = array<i64: 1, 32, 32>}, {transform_indices = @transform_6, window_bounds = array<i64: 1, 1, 32>}, {transform_indices = @transform_7, window_bounds = array<i64: 1, 4, 8, 32>}, {transform_indices = @transform_8, window_bounds = array<i64: 1, 1, 32>}, {transform_indices = @transform_9, window_bounds = array<i64: 1, 1, 32>}, {transform_indices = @transform_10, window_bounds = array<i64: 1, 1, 32>}, {transform_indices = @transform_11, window_bounds = array<i64: 1, 32, 64>}, {transform_indices = @transform_12, window_bounds = array<i64: 1, 1, 64>}, {transform_indices = @transform_13, window_bounds = array<i64: 1, 64, 32>}, {transform_indices = @transform_14, window_bounds = array<i64: 1, 1, 32>}, {transform_indices = @transform_15, window_bounds = array<i64: 1, 1, 32>}, {transform_indices = @transform_16, window_bounds = array<i64: 1, 1, 32>}, {pipeline_mode = #tpu.pipeline_mode<synchronous>, transform_indices = @transform_17, window_bounds = array<i64: 16, 32>}]} {
    %c0_i32 = arith.constant 0 : i32
    %0 = arith.cmpi eq, %arg0, %c0_i32 : i32
    %1 = arith.extui %0 : i1 to i32
    %c0_i32_0 = arith.constant 0 : i32
    %2 = arith.cmpi ne, %1, %c0_i32_0 : i32
    scf.if %2 {
      %c0_89 = arith.constant 0 : index
      %c0_90 = arith.constant 0 : index
      %200 = vector.load %arg1[%c0_89, %c0_90] : memref<16x32xf32, #tpu.memory_space<vmem>>, vector<16x32xf32>
      %c0_91 = arith.constant 0 : index
      %c0_92 = arith.constant 0 : index
      %201 = vector.load %arg18[%c0_91, %c0_92] : memref<16x32xf32, #tpu.memory_space<vmem>>, vector<16x32xf32>
      tpu.vector_store %arg18[%c0_91, %c0_92], %200 {strides = array<i32>} : memref<16x32xf32, #tpu.memory_space<vmem>>, vector<16x32xf32>,
    } else {
    }
    %c0 = arith.constant 0 : index
    %c0_1 = arith.constant 0 : index
    %3 = vector.load %arg18[%c0, %c0_1] : memref<16x32xf32, #tpu.memory_space<vmem>>, vector<16x32xf32>
    %4 = arith.truncf %3 : vector<16x32xf32> to vector<16x32xbf16>
    %c0_2 = arith.constant 0 : index
    %c0_3 = arith.constant 0 : index
    %c0_4 = arith.constant 0 : index
    %5 = vector.load %arg2[%c0_2, %c0_3, %c0_4] : memref<1x32x32xbf16, #tpu.memory_space<vmem>>, vector<1x32x32xbf16>
    %6 = vector.shape_cast %5 : vector<1x32x32xbf16> to vector<32x32xbf16>
    %cst = arith.constant dense<0.000000e+00> : vector<16x32xf32>
    %7 = tpu.matmul %4, %6, %cst {dimension_numbers = #tpu.dot_dimension_numbers<[1], [0], [0], [1], [0, 0, 1, 1], [], []>} : vector<16x32xbf16>, vector<32x32xbf16>, vector<16x32xf32> -> vector<16x32xf32>
    %c0_5 = arith.constant 0 : index
    %c0_6 = arith.constant 0 : index
    %c0_7 = arith.constant 0 : index
    %8 = vector.load %arg3[%c0_5, %c0_6, %c0_7] : memref<1x1x32xf32, #tpu.memory_space<vmem>>, vector<1x1x32xf32>
    %9 = vector.shape_cast %8 : vector<1x1x32xf32> to vector<1x32xf32>
    %10 = vector.broadcast %9 : vector<1x32xf32> to vector<16x32xf32>
    %11 = arith.addf %7, %10 : vector<16x32xf32>
    %c0_8 = arith.constant 0 : index
    %c0_9 = arith.constant 0 : index
    %c0_10 = arith.constant 0 : index
    %12 = vector.load %arg4[%c0_8, %c0_9, %c0_10] : memref<1x32x32xbf16, #tpu.memory_space<vmem>>, vector<1x32x32xbf16>
    %13 = vector.shape_cast %12 : vector<1x32x32xbf16> to vector<32x32xbf16>
    %cst_11 = arith.constant dense<0.000000e+00> : vector<16x32xf32>
    %14 = tpu.matmul %4, %13, %cst_11 {dimension_numbers = #tpu.dot_dimension_numbers<[1], [0], [0], [1], [0, 0, 1, 1], [], []>} : vector<16x32xbf16>, vector<32x32xbf16>, vector<16x32xf32> -> vector<16x32xf32>
    %c0_12 = arith.constant 0 : index
    %c0_13 = arith.constant 0 : index
    %c0_14 = arith.constant 0 : index
    %15 = vector.load %arg5[%c0_12, %c0_13, %c0_14] : memref<1x1x32xf32, #tpu.memory_space<vmem>>, vector<1x1x32xf32>
    %16 = vector.shape_cast %15 : vector<1x1x32xf32> to vector<1x32xf32>
    %17 = vector.broadcast %16 : vector<1x32xf32> to vector<16x32xf32>
    %18 = arith.addf %14, %17 : vector<16x32xf32>
    %c0_15 = arith.constant 0 : index
    %c0_16 = arith.constant 0 : index
    %c0_17 = arith.constant 0 : index
    %19 = vector.load %arg6[%c0_15, %c0_16, %c0_17] : memref<1x32x32xbf16, #tpu.memory_space<vmem>>, vector<1x32x32xbf16>
    %20 = vector.shape_cast %19 : vector<1x32x32xbf16> to vector<32x32xbf16>
    %cst_18 = arith.constant dense<0.000000e+00> : vector<16x32xf32>
    %21 = tpu.matmul %4, %20, %cst_18 {dimension_numbers = #tpu.dot_dimension_numbers<[1], [0], [0], [1], [0, 0, 1, 1], [], []>} : vector<16x32xbf16>, vector<32x32xbf16>, vector<16x32xf32> -> vector<16x32xf32>
    %c0_19 = arith.constant 0 : index
    %c0_20 = arith.constant 0 : index
    %c0_21 = arith.constant 0 : index
    %22 = vector.load %arg7[%c0_19, %c0_20, %c0_21] : memref<1x1x32xf32, #tpu.memory_space<vmem>>, vector<1x1x32xf32>
    %23 = vector.shape_cast %22 : vector<1x1x32xf32> to vector<1x32xf32>
    %24 = vector.broadcast %23 : vector<1x32xf32> to vector<16x32xf32>
    %25 = arith.addf %21, %24 : vector<16x32xf32>
    %26 = arith.truncf %11 : vector<16x32xf32> to vector<16x32xbf16>
    %27 = vector.shape_cast %26 : vector<16x32xbf16> to vector<2x8x32xbf16>
    %28 = arith.truncf %18 : vector<16x32xf32> to vector<16x32xbf16>
    %29 = vector.shape_cast %28 : vector<16x32xbf16> to vector<2x8x32xbf16>
    %30 = arith.truncf %25 : vector<16x32xf32> to vector<16x32xbf16>
    %31 = vector.shape_cast %30 : vector<16x32xbf16> to vector<2x8x32xbf16>
    %c0_22 = arith.constant 0 : index
    %c0_23 = arith.constant 0 : index
    %c0_24 = arith.constant 0 : index
    %c0_25 = arith.constant 0 : index
    %32 = vector.load %arg8[%c0_22, %c0_23, %c0_24, %c0_25] : memref<1x4x8x32xbf16, #tpu.memory_space<vmem>>, vector<1x4x8x32xbf16>
    %33 = vector.shape_cast %32 : vector<1x4x8x32xbf16> to vector<4x8x32xbf16>
    %cst_26 = arith.constant 0.000000e+00 : f32
    %34 = vector.broadcast %cst_26 : f32 to vector<16x32xf32>
    %35 = vector.extract_strided_slice %27 {offsets = [0, 0, 0], sizes = [2, 8, 8], strides = [1, 1, 1]} : vector<2x8x32xbf16> to vector<2x8x8xbf16>
    %36 = vector.extract_strided_slice %29 {offsets = [0, 0, 0], sizes = [2, 8, 8], strides = [1, 1, 1]} : vector<2x8x32xbf16> to vector<2x8x8xbf16>
    %37 = vector.extract_strided_slice %31 {offsets = [0, 0, 0], sizes = [2, 8, 8], strides = [1, 1, 1]} : vector<2x8x32xbf16> to vector<2x8x8xbf16>
    "tpu.trace_start"() <{level = 10 : i32, message = "bqd,bkd->bqk"}> : () -> ()
    %cst_27 = arith.constant dense<0.000000e+00> : vector<2x8x8xf32>
    %38 = tpu.matmul %35, %36, %cst_27 {dimension_numbers = #tpu.dot_dimension_numbers<[2], [2], [1], [1], [0, 0, 0, 1, 1, 1], [0], [0]>} : vector<2x8x8xbf16>, vector<2x8x8xbf16>, vector<2x8x8xf32> -> vector<2x8x8xf32>
    "tpu.trace_stop"() : () -> ()
    %cst_28 = arith.constant dense<0xFF800000> : vector<2x8xf32>
    %39 = vector.multi_reduction <maximumf>, %38, %cst_28 [2] : vector<2x8x8xf32> to vector<2x8xf32>
    %40 = vector.shape_cast %39 : vector<2x8xf32> to vector<2x8x1xf32>
    %41 = vector.broadcast %40 : vector<2x8x1xf32> to vector<2x8x8xf32>
    %42 = arith.subf %38, %41 : vector<2x8x8xf32>
    %43 = math.exp %42 : vector<2x8x8xf32>
    %cst_29 = arith.constant dense<0.000000e+00> : vector<2x8xf32>
    %44 = vector.multi_reduction <add>, %43, %cst_29 [2] : vector<2x8x8xf32> to vector<2x8xf32>
    %45 = vector.shape_cast %44 : vector<2x8xf32> to vector<2x8x1xf32>
    %46 = tpu.reciprocal %45 {approx = true} : vector<2x8x1xf32> -> vector<2x8x1xf32>
    %47 = vector.broadcast %46 : vector<2x8x1xf32> to vector<2x8x8xf32>
    %48 = arith.mulf %43, %47 : vector<2x8x8xf32>
    %49 = arith.truncf %48 : vector<2x8x8xf32> to vector<2x8x8xbf16>
    "tpu.trace_start"() <{level = 10 : i32, message = "bqk,bkd->bqd"}> : () -> ()
    %cst_30 = arith.constant dense<0.000000e+00> : vector<2x8x8xf32>
    %50 = tpu.matmul %49, %37, %cst_30 {dimension_numbers = #tpu.dot_dimension_numbers<[2], [1], [1], [2], [0, 0, 0, 1, 1, 2], [0], [0]>} : vector<2x8x8xbf16>, vector<2x8x8xbf16>, vector<2x8x8xf32> -> vector<2x8x8xf32>
    "tpu.trace_stop"() : () -> ()
    %51 = vector.shape_cast %50 : vector<2x8x8xf32> to vector<16x8xf32>
    %52 = arith.truncf %51 : vector<16x8xf32> to vector<16x8xbf16>
    %53 = vector.extract_strided_slice %33 {offsets = [0, 0, 0], sizes = [1, 8, 32], strides = [1, 1, 1]} : vector<4x8x32xbf16> to vector<1x8x32xbf16>
    %54 = vector.shape_cast %53 : vector<1x8x32xbf16> to vector<8x32xbf16>
    %cst_31 = arith.constant dense<0.000000e+00> : vector<16x32xf32>
    %55 = tpu.matmul %52, %54, %cst_31 {dimension_numbers = #tpu.dot_dimension_numbers<[1], [0], [0], [1], [0, 0, 1, 1], [], []>} : vector<16x8xbf16>, vector<8x32xbf16>, vector<16x32xf32> -> vector<16x32xf32>
    %56 = arith.addf %34, %55 : vector<16x32xf32>
    %57 = vector.extract_strided_slice %27 {offsets = [0, 0, 8], sizes = [2, 8, 8], strides = [1, 1, 1]} : vector<2x8x32xbf16> to vector<2x8x8xbf16>
    %58 = vector.extract_strided_slice %29 {offsets = [0, 0, 8], sizes = [2, 8, 8], strides = [1, 1, 1]} : vector<2x8x32xbf16> to vector<2x8x8xbf16>
    %59 = vector.extract_strided_slice %31 {offsets = [0, 0, 8], sizes = [2, 8, 8], strides = [1, 1, 1]} : vector<2x8x32xbf16> to vector<2x8x8xbf16>
    "tpu.trace_start"() <{level = 10 : i32, message = "bqd,bkd->bqk"}> : () -> ()
    %cst_32 = arith.constant dense<0.000000e+00> : vector<2x8x8xf32>
    %60 = tpu.matmul %57, %58, %cst_32 {dimension_numbers = #tpu.dot_dimension_numbers<[2], [2], [1], [1], [0, 0, 0, 1, 1, 1], [0], [0]>} : vector<2x8x8xbf16>, vector<2x8x8xbf16>, vector<2x8x8xf32> -> vector<2x8x8xf32>
    "tpu.trace_stop"() : () -> ()
    %cst_33 = arith.constant dense<0xFF800000> : vector<2x8xf32>
    %61 = vector.multi_reduction <maximumf>, %60, %cst_33 [2] : vector<2x8x8xf32> to vector<2x8xf32>
    %62 = vector.shape_cast %61 : vector<2x8xf32> to vector<2x8x1xf32>
    %63 = vector.broadcast %62 : vector<2x8x1xf32> to vector<2x8x8xf32>
    %64 = arith.subf %60, %63 : vector<2x8x8xf32>
    %65 = math.exp %64 : vector<2x8x8xf32>
    %cst_34 = arith.constant dense<0.000000e+00> : vector<2x8xf32>
    %66 = vector.multi_reduction <add>, %65, %cst_34 [2] : vector<2x8x8xf32> to vector<2x8xf32>
    %67 = vector.shape_cast %66 : vector<2x8xf32> to vector<2x8x1xf32>
    %68 = tpu.reciprocal %67 {approx = true} : vector<2x8x1xf32> -> vector<2x8x1xf32>
    %69 = vector.broadcast %68 : vector<2x8x1xf32> to vector<2x8x8xf32>
    %70 = arith.mulf %65, %69 : vector<2x8x8xf32>
    %71 = arith.truncf %70 : vector<2x8x8xf32> to vector<2x8x8xbf16>
    "tpu.trace_start"() <{level = 10 : i32, message = "bqk,bkd->bqd"}> : () -> ()
    %cst_35 = arith.constant dense<0.000000e+00> : vector<2x8x8xf32>
    %72 = tpu.matmul %71, %59, %cst_35 {dimension_numbers = #tpu.dot_dimension_numbers<[2], [1], [1], [2], [0, 0, 0, 1, 1, 2], [0], [0]>} : vector<2x8x8xbf16>, vector<2x8x8xbf16>, vector<2x8x8xf32> -> vector<2x8x8xf32>
    "tpu.trace_stop"() : () -> ()
    %73 = vector.shape_cast %72 : vector<2x8x8xf32> to vector<16x8xf32>
    %74 = arith.truncf %73 : vector<16x8xf32> to vector<16x8xbf16>
    %75 = vector.extract_strided_slice %33 {offsets = [1, 0, 0], sizes = [1, 8, 32], strides = [1, 1, 1]} : vector<4x8x32xbf16> to vector<1x8x32xbf16>
    %76 = vector.shape_cast %75 : vector<1x8x32xbf16> to vector<8x32xbf16>
    %cst_36 = arith.constant dense<0.000000e+00> : vector<16x32xf32>
    %77 = tpu.matmul %74, %76, %cst_36 {dimension_numbers = #tpu.dot_dimension_numbers<[1], [0], [0], [1], [0, 0, 1, 1], [], []>} : vector<16x8xbf16>, vector<8x32xbf16>, vector<16x32xf32> -> vector<16x32xf32>
    %78 = arith.addf %56, %77 : vector<16x32xf32>
    %79 = vector.extract_strided_slice %27 {offsets = [0, 0, 16], sizes = [2, 8, 8], strides = [1, 1, 1]} : vector<2x8x32xbf16> to vector<2x8x8xbf16>
    %80 = vector.extract_strided_slice %29 {offsets = [0, 0, 16], sizes = [2, 8, 8], strides = [1, 1, 1]} : vector<2x8x32xbf16> to vector<2x8x8xbf16>
    %81 = vector.extract_strided_slice %31 {offsets = [0, 0, 16], sizes = [2, 8, 8], strides = [1, 1, 1]} : vector<2x8x32xbf16> to vector<2x8x8xbf16>
    "tpu.trace_start"() <{level = 10 : i32, message = "bqd,bkd->bqk"}> : () -> ()
    %cst_37 = arith.constant dense<0.000000e+00> : vector<2x8x8xf32>
    %82 = tpu.matmul %79, %80, %cst_37 {dimension_numbers = #tpu.dot_dimension_numbers<[2], [2], [1], [1], [0, 0, 0, 1, 1, 1], [0], [0]>} : vector<2x8x8xbf16>, vector<2x8x8xbf16>, vector<2x8x8xf32> -> vector<2x8x8xf32>
    "tpu.trace_stop"() : () -> ()
    %cst_38 = arith.constant dense<0xFF800000> : vector<2x8xf32>
    %83 = vector.multi_reduction <maximumf>, %82, %cst_38 [2] : vector<2x8x8xf32> to vector<2x8xf32>
    %84 = vector.shape_cast %83 : vector<2x8xf32> to vector<2x8x1xf32>
    %85 = vector.broadcast %84 : vector<2x8x1xf32> to vector<2x8x8xf32>
    %86 = arith.subf %82, %85 : vector<2x8x8xf32>
    %87 = math.exp %86 : vector<2x8x8xf32>
    %cst_39 = arith.constant dense<0.000000e+00> : vector<2x8xf32>
    %88 = vector.multi_reduction <add>, %87, %cst_39 [2] : vector<2x8x8xf32> to vector<2x8xf32>
    %89 = vector.shape_cast %88 : vector<2x8xf32> to vector<2x8x1xf32>
    %90 = tpu.reciprocal %89 {approx = true} : vector<2x8x1xf32> -> vector<2x8x1xf32>
    %91 = vector.broadcast %90 : vector<2x8x1xf32> to vector<2x8x8xf32>
    %92 = arith.mulf %87, %91 : vector<2x8x8xf32>
    %93 = arith.truncf %92 : vector<2x8x8xf32> to vector<2x8x8xbf16>
    "tpu.trace_start"() <{level = 10 : i32, message = "bqk,bkd->bqd"}> : () -> ()
    %cst_40 = arith.constant dense<0.000000e+00> : vector<2x8x8xf32>
    %94 = tpu.matmul %93, %81, %cst_40 {dimension_numbers = #tpu.dot_dimension_numbers<[2], [1], [1], [2], [0, 0, 0, 1, 1, 2], [0], [0]>} : vector<2x8x8xbf16>, vector<2x8x8xbf16>, vector<2x8x8xf32> -> vector<2x8x8xf32>
    "tpu.trace_stop"() : () -> ()
    %95 = vector.shape_cast %94 : vector<2x8x8xf32> to vector<16x8xf32>
    %96 = arith.truncf %95 : vector<16x8xf32> to vector<16x8xbf16>
    %97 = vector.extract_strided_slice %33 {offsets = [2, 0, 0], sizes = [1, 8, 32], strides = [1, 1, 1]} : vector<4x8x32xbf16> to vector<1x8x32xbf16>
    %98 = vector.shape_cast %97 : vector<1x8x32xbf16> to vector<8x32xbf16>
    %cst_41 = arith.constant dense<0.000000e+00> : vector<16x32xf32>
    %99 = tpu.matmul %96, %98, %cst_41 {dimension_numbers = #tpu.dot_dimension_numbers<[1], [0], [0], [1], [0, 0, 1, 1], [], []>} : vector<16x8xbf16>, vector<8x32xbf16>, vector<16x32xf32> -> vector<16x32xf32>
    %100 = arith.addf %78, %99 : vector<16x32xf32>
    %101 = vector.extract_strided_slice %27 {offsets = [0, 0, 24], sizes = [2, 8, 8], strides = [1, 1, 1]} : vector<2x8x32xbf16> to vector<2x8x8xbf16>
    %102 = vector.extract_strided_slice %29 {offsets = [0, 0, 24], sizes = [2, 8, 8], strides = [1, 1, 1]} : vector<2x8x32xbf16> to vector<2x8x8xbf16>
    %103 = vector.extract_strided_slice %31 {offsets = [0, 0, 24], sizes = [2, 8, 8], strides = [1, 1, 1]} : vector<2x8x32xbf16> to vector<2x8x8xbf16>
    "tpu.trace_start"() <{level = 10 : i32, message = "bqd,bkd->bqk"}> : () -> ()
    %cst_42 = arith.constant dense<0.000000e+00> : vector<2x8x8xf32>
    %104 = tpu.matmul %101, %102, %cst_42 {dimension_numbers = #tpu.dot_dimension_numbers<[2], [2], [1], [1], [0, 0, 0, 1, 1, 1], [0], [0]>} : vector<2x8x8xbf16>, vector<2x8x8xbf16>, vector<2x8x8xf32> -> vector<2x8x8xf32>
    "tpu.trace_stop"() : () -> ()
    %cst_43 = arith.constant dense<0xFF800000> : vector<2x8xf32>
    %105 = vector.multi_reduction <maximumf>, %104, %cst_43 [2] : vector<2x8x8xf32> to vector<2x8xf32>
    %106 = vector.shape_cast %105 : vector<2x8xf32> to vector<2x8x1xf32>
    %107 = vector.broadcast %106 : vector<2x8x1xf32> to vector<2x8x8xf32>
    %108 = arith.subf %104, %107 : vector<2x8x8xf32>
    %109 = math.exp %108 : vector<2x8x8xf32>
    %cst_44 = arith.constant dense<0.000000e+00> : vector<2x8xf32>
    %110 = vector.multi_reduction <add>, %109, %cst_44 [2] : vector<2x8x8xf32> to vector<2x8xf32>
    %111 = vector.shape_cast %110 : vector<2x8xf32> to vector<2x8x1xf32>
    %112 = tpu.reciprocal %111 {approx = true} : vector<2x8x1xf32> -> vector<2x8x1xf32>
    %113 = vector.broadcast %112 : vector<2x8x1xf32> to vector<2x8x8xf32>
    %114 = arith.mulf %109, %113 : vector<2x8x8xf32>
    %115 = arith.truncf %114 : vector<2x8x8xf32> to vector<2x8x8xbf16>
    "tpu.trace_start"() <{level = 10 : i32, message = "bqk,bkd->bqd"}> : () -> ()
    %cst_45 = arith.constant dense<0.000000e+00> : vector<2x8x8xf32>
    %116 = tpu.matmul %115, %103, %cst_45 {dimension_numbers = #tpu.dot_dimension_numbers<[2], [1], [1], [2], [0, 0, 0, 1, 1, 2], [0], [0]>} : vector<2x8x8xbf16>, vector<2x8x8xbf16>, vector<2x8x8xf32> -> vector<2x8x8xf32>
    "tpu.trace_stop"() : () -> ()
    %117 = vector.shape_cast %116 : vector<2x8x8xf32> to vector<16x8xf32>
    %118 = arith.truncf %117 : vector<16x8xf32> to vector<16x8xbf16>
    %119 = vector.extract_strided_slice %33 {offsets = [3, 0, 0], sizes = [1, 8, 32], strides = [1, 1, 1]} : vector<4x8x32xbf16> to vector<1x8x32xbf16>
    %120 = vector.shape_cast %119 : vector<1x8x32xbf16> to vector<8x32xbf16>
    %cst_46 = arith.constant dense<0.000000e+00> : vector<16x32xf32>
    %121 = tpu.matmul %118, %120, %cst_46 {dimension_numbers = #tpu.dot_dimension_numbers<[1], [0], [0], [1], [0, 0, 1, 1], [], []>} : vector<16x8xbf16>, vector<8x32xbf16>, vector<16x32xf32> -> vector<16x32xf32>
    %122 = arith.addf %100, %121 : vector<16x32xf32>
    %c0_47 = arith.constant 0 : index
    %c0_48 = arith.constant 0 : index
    %c0_49 = arith.constant 0 : index
    %123 = vector.load %arg9[%c0_47, %c0_48, %c0_49] : memref<1x1x32xf32, #tpu.memory_space<vmem>>, vector<1x1x32xf32>
    %124 = vector.shape_cast %123 : vector<1x1x32xf32> to vector<1x32xf32>
    %125 = vector.broadcast %124 : vector<1x32xf32> to vector<16x32xf32>
    %126 = arith.addf %122, %125 : vector<16x32xf32>
    %127 = arith.addf %3, %126 : vector<16x32xf32>
    %c0_50 = arith.constant 0 : index
    %c0_51 = arith.constant 0 : index
    %c0_52 = arith.constant 0 : index
    %128 = vector.load %arg10[%c0_50, %c0_51, %c0_52] : memref<1x1x32xf32, #tpu.memory_space<vmem>>, vector<1x1x32xf32>
    %129 = vector.shape_cast %128 : vector<1x1x32xf32> to vector<1x32xf32>
    %c0_53 = arith.constant 0 : index
    %c0_54 = arith.constant 0 : index
    %c0_55 = arith.constant 0 : index
    %130 = vector.load %arg11[%c0_53, %c0_54, %c0_55] : memref<1x1x32xf32, #tpu.memory_space<vmem>>, vector<1x1x32xf32>
    %131 = vector.shape_cast %130 : vector<1x1x32xf32> to vector<1x32xf32>
    %cst_56 = arith.constant dense<0.000000e+00> : vector<16xf32>
    %132 = vector.multi_reduction <add>, %127, %cst_56 [1] : vector<16x32xf32> to vector<16xf32>
    %133 = vector.shape_cast %132 : vector<16xf32> to vector<16x1xf32>
    %cst_57 = arith.constant 3.200000e+01 : f32
    %134 = vector.broadcast %cst_57 : f32 to vector<16x1xf32>
    %135 = arith.divf %133, %134 : vector<16x1xf32>
    %136 = vector.broadcast %135 : vector<16x1xf32> to vector<16x32xf32>
    %137 = arith.subf %127, %136 : vector<16x32xf32>
    %138 = arith.mulf %137, %137 : vector<16x32xf32>
    %cst_58 = arith.constant dense<0.000000e+00> : vector<16xf32>
    %139 = vector.multi_reduction <add>, %138, %cst_58 [1] : vector<16x32xf32> to vector<16xf32>
    %140 = vector.shape_cast %139 : vector<16xf32> to vector<16x1xf32>
    %cst_59 = arith.constant 3.200000e+01 : f32
    %141 = vector.broadcast %cst_59 : f32 to vector<16x1xf32>
    %142 = arith.divf %140, %141 : vector<16x1xf32>
    %143 = vector.broadcast %135 : vector<16x1xf32> to vector<16x32xf32>
    %144 = arith.subf %127, %143 : vector<16x32xf32>
    %cst_60 = arith.constant 9.99999974E-6 : f32
    %145 = vector.broadcast %cst_60 : f32 to vector<16x1xf32>
    %146 = arith.addf %142, %145 : vector<16x1xf32>
    %147 = math.rsqrt %146 : vector<16x1xf32>
    %148 = vector.broadcast %147 : vector<16x1xf32> to vector<16x32xf32>
    %149 = arith.mulf %144, %148 : vector<16x32xf32>
    %150 = vector.broadcast %129 : vector<1x32xf32> to vector<16x32xf32>
    %151 = arith.mulf %149, %150 : vector<16x32xf32>
    %152 = vector.broadcast %131 : vector<1x32xf32> to vector<16x32xf32>
    %153 = arith.addf %151, %152 : vector<16x32xf32>
    %154 = arith.truncf %153 : vector<16x32xf32> to vector<16x32xbf16>
    %c0_61 = arith.constant 0 : index
    %c0_62 = arith.constant 0 : index
    %c0_63 = arith.constant 0 : index
    %155 = vector.load %arg12[%c0_61, %c0_62, %c0_63] : memref<1x32x64xbf16, #tpu.memory_space<vmem>>, vector<1x32x64xbf16>
    %156 = vector.shape_cast %155 : vector<1x32x64xbf16> to vector<32x64xbf16>
    %cst_64 = arith.constant dense<0.000000e+00> : vector<16x64xf32>
    %157 = tpu.matmul %154, %156, %cst_64 {dimension_numbers = #tpu.dot_dimension_numbers<[1], [0], [0], [1], [0, 0, 1, 1], [], []>} : vector<16x32xbf16>, vector<32x64xbf16>, vector<16x64xf32> -> vector<16x64xf32>
    %c0_65 = arith.constant 0 : index
    %c0_66 = arith.constant 0 : index
    %c0_67 = arith.constant 0 : index
    %158 = vector.load %arg13[%c0_65, %c0_66, %c0_67] : memref<1x1x64xf32, #tpu.memory_space<vmem>>, vector<1x1x64xf32>
    %159 = vector.shape_cast %158 : vector<1x1x64xf32> to vector<1x64xf32>
    %160 = vector.broadcast %159 : vector<1x64xf32> to vector<16x64xf32>
    %161 = arith.addf %157, %160 : vector<16x64xf32>
    %cst_68 = arith.constant 0.000000e+00 : f32
    %162 = vector.broadcast %cst_68 : f32 to vector<16x64xf32>
    %163 = arith.maximumf %161, %162 : vector<16x64xf32>
    %164 = arith.truncf %163 : vector<16x64xf32> to vector<16x64xbf16>
    %c0_69 = arith.constant 0 : index
    %c0_70 = arith.constant 0 : index
    %c0_71 = arith.constant 0 : index
    %165 = vector.load %arg14[%c0_69, %c0_70, %c0_71] : memref<1x64x32xbf16, #tpu.memory_space<vmem>>, vector<1x64x32xbf16>
    %166 = vector.shape_cast %165 : vector<1x64x32xbf16> to vector<64x32xbf16>
    %cst_72 = arith.constant dense<0.000000e+00> : vector<16x32xf32>
    %167 = tpu.matmul %164, %166, %cst_72 {dimension_numbers = #tpu.dot_dimension_numbers<[1], [0], [0], [1], [0, 0, 1, 1], [], []>} : vector<16x64xbf16>, vector<64x32xbf16>, vector<16x32xf32> -> vector<16x32xf32>
    %c0_73 = arith.constant 0 : index
    %c0_74 = arith.constant 0 : index
    %c0_75 = arith.constant 0 : index
    %168 = vector.load %arg15[%c0_73, %c0_74, %c0_75] : memref<1x1x32xf32, #tpu.memory_space<vmem>>, vector<1x1x32xf32>
    %169 = vector.shape_cast %168 : vector<1x1x32xf32> to vector<1x32xf32>
    %170 = vector.broadcast %169 : vector<1x32xf32> to vector<16x32xf32>
    %171 = arith.addf %167, %170 : vector<16x32xf32>
    %172 = arith.addf %153, %171 : vector<16x32xf32>
    %c0_76 = arith.constant 0 : index
    %c0_77 = arith.constant 0 : index
    %c0_78 = arith.constant 0 : index
    %173 = vector.load %arg16[%c0_76, %c0_77, %c0_78] : memref<1x1x32xf32, #tpu.memory_space<vmem>>, vector<1x1x32xf32>
    %174 = vector.shape_cast %173 : vector<1x1x32xf32> to vector<1x32xf32>
    %c0_79 = arith.constant 0 : index
    %c0_80 = arith.constant 0 : index
    %c0_81 = arith.constant 0 : index
    %175 = vector.load %arg17[%c0_79, %c0_80, %c0_81] : memref<1x1x32xf32, #tpu.memory_space<vmem>>, vector<1x1x32xf32>
    %176 = vector.shape_cast %175 : vector<1x1x32xf32> to vector<1x32xf32>
    %cst_82 = arith.constant dense<0.000000e+00> : vector<16xf32>
    %177 = vector.multi_reduction <add>, %172, %cst_82 [1] : vector<16x32xf32> to vector<16xf32>
    %178 = vector.shape_cast %177 : vector<16xf32> to vector<16x1xf32>
    %cst_83 = arith.constant 3.200000e+01 : f32
    %179 = vector.broadcast %cst_83 : f32 to vector<16x1xf32>
    %180 = arith.divf %178, %179 : vector<16x1xf32>
    %181 = vector.broadcast %180 : vector<16x1xf32> to vector<16x32xf32>
    %182 = arith.subf %172, %181 : vector<16x32xf32>
    %183 = arith.mulf %182, %182 : vector<16x32xf32>
    %cst_84 = arith.constant dense<0.000000e+00> : vector<16xf32>
    %184 = vector.multi_reduction <add>, %183, %cst_84 [1] : vector<16x32xf32> to vector<16xf32>
    %185 = vector.shape_cast %184 : vector<16xf32> to vector<16x1xf32>
    %cst_85 = arith.constant 3.200000e+01 : f32
    %186 = vector.broadcast %cst_85 : f32 to vector<16x1xf32>
    %187 = arith.divf %185, %186 : vector<16x1xf32>
    %188 = vector.broadcast %180 : vector<16x1xf32> to vector<16x32xf32>
    %189 = arith.subf %172, %188 : vector<16x32xf32>
    %cst_86 = arith.constant 9.99999974E-6 : f32
    %190 = vector.broadcast %cst_86 : f32 to vector<16x1xf32>
    %191 = arith.addf %187, %190 : vector<16x1xf32>
    %192 = math.rsqrt %191 : vector<16x1xf32>
    %193 = vector.broadcast %192 : vector<16x1xf32> to vector<16x32xf32>
    %194 = arith.mulf %189, %193 : vector<16x32xf32>
    %195 = vector.broadcast %174 : vector<1x32xf32> to vector<16x32xf32>
    %196 = arith.mulf %194, %195 : vector<16x32xf32>
    %197 = vector.broadcast %176 : vector<1x32xf32> to vector<16x32xf32>
    %198 = arith.addf %196, %197 : vector<16x32xf32>
    %c0_87 = arith.constant 0 : index
    %c0_88 = arith.constant 0 : index
    %199 = vector.load %arg18[%c0_87, %c0_88] : memref<16x32xf32, #tpu.memory_space<vmem>>, vector<16x32xf32>
    tpu.vector_store %arg18[%c0_87, %c0_88], %198 {strides = array<i32>} : memref<16x32xf32, #tpu.memory_space<vmem>>, vector<16x32xf32>,
    return
  }
  func.func @transform_0(%arg0: i32) -> (i32, i32) {
    %c0_i32 = arith.constant 0 : i32
    %c0_i32_0 = arith.constant 0 : i32
    %c0_i32_1 = arith.constant 0 : i32
    return %c0_i32, %c0_i32_0 : i32, i32
  }
  func.func @transform_1(%arg0: i32) -> (i32, i32, i32) {
    %c0_i32 = arith.constant 0 : i32
    %c0_i32_0 = arith.constant 0 : i32
    %c0_i32_1 = arith.constant 0 : i32
    return %arg0, %c0_i32, %c0_i32_0 : i32, i32, i32
  }
  func.func @transform_2(%arg0: i32) -> (i32, i32, i32) {
    %c0_i32 = arith.constant 0 : i32
    %c0_i32_0 = arith.constant 0 : i32
    %c0_i32_1 = arith.constant 0 : i32
    return %arg0, %c0_i32, %c0_i32_0 : i32, i32, i32
  }
  func.func @transform_3(%arg0: i32) -> (i32, i32, i32) {
    %c0_i32 = arith.constant 0 : i32
    %c0_i32_0 = arith.constant 0 : i32
    %c0_i32_1 = arith.constant 0 : i32
    return %arg0, %c0_i32, %c0_i32_0 : i32, i32, i32
  }
  func.func @transform_4(%arg0: i32) -> (i32, i32, i32) {
    %c0_i32 = arith.constant 0 : i32
    %c0_i32_0 = arith.constant 0 : i32
    %c0_i32_1 = arith.constant 0 : i32
    return %arg0, %c0_i32, %c0_i32_0 : i32, i32, i32
  }
  func.func @transform_5(%arg0: i32) -> (i32, i32, i32) {
    %c0_i32 = arith.constant 0 : i32
    %c0_i32_0 = arith.constant 0 : i32
    %c0_i32_1 = arith.constant 0 : i32
    return %arg0, %c0_i32, %c0_i32_0 : i32, i32, i32
  }
  func.func @transform_6(%arg0: i32) -> (i32, i32, i32) {
    %c0_i32 = arith.constant 0 : i32
    %c0_i32_0 = arith.constant 0 : i32
    %c0_i32_1 = arith.constant 0 : i32
    return %arg0, %c0_i32, %c0_i32_0 : i32, i32, i32
  }
  func.func @transform_7(%arg0: i32) -> (i32, i32, i32, i32) {
    %c0_i32 = arith.constant 0 : i32
    %c0_i32_0 = arith.constant 0 : i32
    %c0_i32_1 = arith.constant 0 : i32
    %c0_i32_2 = arith.constant 0 : i32
    return %arg0, %c0_i32, %c0_i32_0, %c0_i32_1 : i32, i32, i32, i32
  }
  func.func @transform_8(%arg0: i32) -> (i32, i32, i32) {
    %c0_i32 = arith.constant 0 : i32
    %c0_i32_0 = arith.constant 0 : i32
    %c0_i32_1 = arith.constant 0 : i32
    return %arg0, %c0_i32, %c0_i32_0 : i32, i32, i32
  }
  func.func @transform_9(%arg0: i32) -> (i32, i32, i32) {
    %c0_i32 = arith.constant 0 : i32
    %c0_i32_0 = arith.constant 0 : i32
    %c0_i32_1 = arith.constant 0 : i32
    return %arg0, %c0_i32, %c0_i32_0 : i32, i32, i32
  }
  func.func @transform_10(%arg0: i32) -> (i32, i32, i32) {
    %c0_i32 = arith.constant 0 : i32
    %c0_i32_0 = arith.constant 0 : i32
    %c0_i32_1 = arith.constant 0 : i32
    return %arg0, %c0_i32, %c0_i32_0 : i32, i32, i32
  }
  func.func @transform_11(%arg0: i32) -> (i32, i32, i32) {
    %c0_i32 = arith.constant 0 : i32
    %c0_i32_0 = arith.constant 0 : i32
    %c0_i32_1 = arith.constant 0 : i32
    return %arg0, %c0_i32, %c0_i32_0 : i32, i32, i32
  }
  func.func @transform_12(%arg0: i32) -> (i32, i32, i32) {
    %c0_i32 = arith.constant 0 : i32
    %c0_i32_0 = arith.constant 0 : i32
    %c0_i32_1 = arith.constant 0 : i32
    return %arg0, %c0_i32, %c0_i32_0 : i32, i32, i32
  }
  func.func @transform_13(%arg0: i32) -> (i32, i32, i32) {
    %c0_i32 = arith.constant 0 : i32
    %c0_i32_0 = arith.constant 0 : i32
    %c0_i32_1 = arith.constant 0 : i32
    return %arg0, %c0_i32, %c0_i32_0 : i32, i32, i32
  }
  func.func @transform_14(%arg0: i32) -> (i32, i32, i32) {
    %c0_i32 = arith.constant 0 : i32
    %c0_i32_0 = arith.constant 0 : i32
    %c0_i32_1 = arith.constant 0 : i32
    return %arg0, %c0_i32, %c0_i32_0 : i32, i32, i32
  }
  func.func @transform_15(%arg0: i32) -> (i32, i32, i32) {
    %c0_i32 = arith.constant 0 : i32
    %c0_i32_0 = arith.constant 0 : i32
    %c0_i32_1 = arith.constant 0 : i32
    return %arg0, %c0_i32, %c0_i32_0 : i32, i32, i32
  }
  func.func @transform_16(%arg0: i32) -> (i32, i32, i32) {
    %c0_i32 = arith.constant 0 : i32
    %c0_i32_0 = arith.constant 0 : i32
    %c0_i32_1 = arith.constant 0 : i32
    return %arg0, %c0_i32, %c0_i32_0 : i32, i32, i32
  }
  func.func @transform_17(%arg0: i32) -> (i32, i32) {
    %c0_i32 = arith.constant 0 : i32
    %c0_i32_0 = arith.constant 0 : i32
    %c0_i32_1 = arith.constant 0 : i32
    return %c0_i32, %c0_i32_0 : i32, i32
  }
}

</mosaic_0001>

<llo_original>
// kernel: tpu_custom_call.1
$region0: #{tpu_custom_call.1}
  #allocation0 [shape = 'u32[]', space=smem, size = 0x4, offset = 0x4, fixed_abs, tag = 'smem constant byte address 0x4 - core index']
  #allocation1 [shape = 'u32[144,128]{1,0:T(1,128)}', space=vmem, size = 0x12000, scoped, tag = 'internal scratch']
  %s0 = inlined_call_operand.hbm [shape: f32[16,32], index: 0, kind: input, shape index: {}]
  %s1 = inlined_call_operand.vmem [shape: bf16[2,32,32], index: 1, kind: input, shape index: {}]
  %s2 = inlined_call_operand.vmem [shape: f32[2,1,32], index: 2, kind: input, shape index: {}]
  %s3 = inlined_call_operand.vmem [shape: bf16[2,32,32], index: 3, kind: input, shape index: {}]
  %s4 = inlined_call_operand.vmem [shape: f32[2,1,32], index: 4, kind: input, shape index: {}]
  %s5 = inlined_call_operand.vmem [shape: bf16[2,32,32], index: 5, kind: input, shape index: {}]
  %s6 = inlined_call_operand.vmem [shape: f32[2,1,32], index: 6, kind: input, shape index: {}]
  %s7 = inlined_call_operand.hbm [shape: bf16[2,4,8,32], index: 7, kind: input, shape index: {}]
  %s8 = inlined_call_operand.vmem [shape: f32[2,1,32], index: 8, kind: input, shape index: {}]
  %s9 = inlined_call_operand.vmem [shape: f32[2,1,32], index: 9, kind: input, shape index: {}]
  %s10 = inlined_call_operand.vmem [shape: f32[2,1,32], index: 10, kind: input, shape index: {}]
  %s11 = inlined_call_operand.hbm [shape: bf16[2,32,64], index: 11, kind: input, shape index: {}]
  %s12 = inlined_call_operand.vmem [shape: f32[2,1,64], index: 12, kind: input, shape index: {}]
  %s13 = inlined_call_operand.vmem [shape: bf16[2,64,32], index: 13, kind: input, shape index: {}]
  %s14 = inlined_call_operand.vmem [shape: f32[2,1,32], index: 14, kind: input, shape index: {}]
  %s15 = inlined_call_operand.vmem [shape: f32[2,1,32], index: 15, kind: input, shape index: {}]
  %s16 = inlined_call_operand.vmem [shape: f32[2,1,32], index: 16, kind: input, shape index: {}]
  %s17 = inlined_call_operand.hbm [shape: f32[16,32], index: 17, kind: output, shape index: {}]
  %s18 = sld [smem:[#allocation0]]
  $region117: #{tpu_custom_call.1} parent=0
    _
  %s20 = ssub.s32 1, %s18
  %s21 = scalar_select 0, %s20, %s18
  $region1: #{tpu_custom_call.1} parent=0
    #allocation2 [shape = 'u8[8192]{0}', space=vmem, size = 0x2000, scoped, tag = 'input window, operand 0, single buffered']
    #allocation3 [shape = 's32[2]{0}', space=sflag, size = 0x8, scoped, tag = 'scoped memory for tpu_custom_call.1']
    #allocation4 [shape = 's32[2]{0}', space=sflag, size = 0x8, scoped, tag = 'scoped memory for tpu_custom_call.1']
    #allocation5 [shape = 'u8[16384]{0}', space=vmem, size = 0x4000, scoped, tag = 'input window, operand 7']
    #allocation6 [shape = 's32[2]{0}', space=sflag, size = 0x8, scoped, tag = 'scoped memory for tpu_custom_call.1']
    #allocation7 [shape = 'u8[16384]{0}', space=vmem, size = 0x4000, scoped, tag = 'input window, operand 11']
    #allocation8 [shape = 'u8[8192]{0}', space=vmem, size = 0x2000, scoped, tag = 'output window, operand 0, single buffered']
    %22 = vsyncpa [#allocation3], 0
    %23 = vsyncpa [#allocation6], 0
    %s24 = scalar_lea.sflag [#allocation6], 1
    %25 = vsyncpa %s24, 0
    %26 = vsyncpa [#allocation4], 0
    loop: start=0, step=1, limit=4
    $region2: #{tpu_custom_call.1} parent=1 // loop_pre_header
      _
    $region3: #{tpu_custom_call.1} parent=1 // loop_header
      %s28 = sphi 0, %s32
      %p29 = scmp.ge.s32.totalorder %s28, 4
      %s36 = sphi 0, %s36
      %s38 = sphi 0, %s36
      %s39 = sphi 0, %s38
      %s53 = sphi 0, %s39
      %s59 = sphi 0, %s61
      %s62 = sphi 0, %s59
      %s63 = sphi 0, %s62
      %s79 = sphi 0, %s63
      %s85 = sphi 0, %s87
      %s88 = sphi 0, %s85
      %s89 = sphi 0, %s88
      %s105 = sphi 0, %s89
      %s111 = sphi 0, %s113
      %s114 = sphi 0, %s111
      %s115 = sphi 0, %s114
      %s131 = sphi 0, %s115
      %s137 = sphi 0, %s139
      %s140 = sphi 0, %s137
      %s141 = sphi 0, %s140
      %s157 = sphi 0, %s141
      %s163 = sphi 0, %s165
      %s166 = sphi 0, %s163
      %s167 = sphi 0, %s166
      %s183 = sphi 0, %s167
      %s189 = sphi 0, %s191
      %s192 = sphi 0, %s189
      %s193 = sphi 0, %s192
      %s209 = sphi 0, %s193
      %s215 = sphi 0, %s217
      %s218 = sphi 0, %s215
      %s219 = sphi 0, %s218
      %s235 = sphi 0, %s219
      %s241 = sphi 0, %s243
      %s244 = sphi 0, %s241
      %s245 = sphi 0, %s244
      %s261 = sphi 0, %s245
      %s267 = sphi 0, %s269
      %s270 = sphi 0, %s267
      %s271 = sphi 0, %s270
      %s287 = sphi 0, %s271
      %s293 = sphi 0, %s295
      %s296 = sphi 0, %s293
      %s297 = sphi 0, %s296
      %s313 = sphi 0, %s297
      %s319 = sphi 0, %s321
      %s322 = sphi 0, %s319
      %s323 = sphi 0, %s322
      %s339 = sphi 0, %s323
      %s345 = sphi 0, %s347
      %s348 = sphi 0, %s345
      %s349 = sphi 0, %s348
      %s365 = sphi 0, %s349
      %s371 = sphi 0, %s373
      %s374 = sphi 0, %s371
      %s375 = sphi 0, %s374
      %s391 = sphi 0, %s375
      %s397 = sphi 0, %s399
      %s400 = sphi 0, %s397
      %s401 = sphi 0, %s400
      %s417 = sphi 0, %s401
      %s423 = sphi 0, %s425
      %s426 = sphi 0, %s423
      %s427 = sphi 0, %s426
      %s443 = sphi 0, %s427
      %s449 = sphi 0, %s451
      %s452 = sphi 0, %s449
      %s453 = sphi 0, %s452
      %s469 = sphi 0, %s453
      %s473 = sphi 0, %s473
      %s475 = sphi 0, %s473
      %s476 = sphi 0, %s475
      %s490 = sphi 0, %s476
    $region4: #{tpu_custom_call.1} parent=1 // loop_header_branch
      %31 = sbr.rel (%p29) target = $region8
    $region5: #{tpu_custom_call.1} parent=1 // loop_body
      %s33 = ssub.s32 %s28, 1
      %s34 = ssub.s32 %s28, 2
      %s35 = sadd.s32 %s28, 1
      %s37 = sadd.s32 %s36, 1
      %p40 = scmp.eq.s32.totalorder %s28, 1
      %p41 = scmp.ne.s32.totalorder %s36, %s38
      %p42 = scmp.eq.s32.totalorder %s28, 0
      %p43 = por %p41, %p42
      %p44 = scmp.ne.s32.totalorder %s36, %s38
      %p45 = scmp.eq.s32.totalorder %s33, 1
      %p46 = por %p44, %p45
      %p47 = scmp.ne.s32.totalorder %s38, %s39
      %p48 = scmp.eq.s32.totalorder %s33, 0
      %p49 = por %p47, %p48
      %p50 = scmp.ne.s32.totalorder %s38, %s39
      %p51 = scmp.eq.s32.totalorder %s34, 1
      %p52 = por %p50, %p51
      %p54 = scmp.ne.s32.totalorder %s39, %s53
      %p55 = scmp.eq.s32.totalorder %s34, 0
      %p56 = por %p54, %p55
      %s57 = ssub.s32 %s28, %s35
      %p58 = scmp.eq.s32.totalorder %s57, 0
      %s60 = sadd.s32 %s59, 1
      %s61 = scalar_select %p58, %s59, %s60
      %p64 = pneg %p58
      %p65 = scmp.eq.s32.totalorder %s28, 1
      %p66 = por %p64, %p65
      %p67 = scmp.ne.s32.totalorder %s59, %s62
      %p68 = scmp.eq.s32.totalorder %s28, 0
      %p69 = por %p67, %p68
      %p70 = scmp.ne.s32.totalorder %s59, %s62
      %p71 = scmp.eq.s32.totalorder %s33, 1
      %p72 = por %p70, %p71
      %p73 = scmp.ne.s32.totalorder %s62, %s63
      %p74 = scmp.eq.s32.totalorder %s33, 0
      %p75 = por %p73, %p74
      %p76 = scmp.ne.s32.totalorder %s62, %s63
      %p77 = scmp.eq.s32.totalorder %s34, 1
      %p78 = por %p76, %p77
      %p80 = scmp.ne.s32.totalorder %s63, %s79
      %p81 = scmp.eq.s32.totalorder %s34, 0
      %p82 = por %p80, %p81
      %s83 = ssub.s32 %s28, %s35
      %p84 = scmp.eq.s32.totalorder %s83, 0
      %s86 = sadd.s32 %s85, 1
      %s87 = scalar_select %p84, %s85, %s86
      %p90 = pneg %p84
      %p91 = scmp.eq.s32.totalorder %s28, 1
      %p92 = por %p90, %p91
      %p93 = scmp.ne.s32.totalorder %s85, %s88
      %p94 = scmp.eq.s32.totalorder %s28, 0
      %p95 = por %p93, %p94
      %p96 = scmp.ne.s32.totalorder %s85, %s88
      %p97 = scmp.eq.s32.totalorder %s33, 1
      %p98 = por %p96, %p97
      %p99 = scmp.ne.s32.totalorder %s88, %s89
      %p100 = scmp.eq.s32.totalorder %s33, 0
      %p101 = por %p99, %p100
      %p102 = scmp.ne.s32.totalorder %s88, %s89
      %p103 = scmp.eq.s32.totalorder %s34, 1
      %p104 = por %p102, %p103
      %p106 = scmp.ne.s32.totalorder %s89, %s105
      %p107 = scmp.eq.s32.totalorder %s34, 0
      %p108 = por %p106, %p107
      %s109 = ssub.s32 %s28, %s35
      %p110 = scmp.eq.s32.totalorder %s109, 0
      %s112 = sadd.s32 %s111, 1
      %s113 = scalar_select %p110, %s111, %s112
      %p116 = pneg %p110
      %p117 = scmp.eq.s32.totalorder %s28, 1
      %p118 = por %p116, %p117
      %p119 = scmp.ne.s32.totalorder %s111, %s114
      %p120 = scmp.eq.s32.totalorder %s28, 0
      %p121 = por %p119, %p120
      %p122 = scmp.ne.s32.totalorder %s111, %s114
      %p123 = scmp.eq.s32.totalorder %s33, 1
      %p124 = por %p122, %p123
      %p125 = scmp.ne.s32.totalorder %s114, %s115
      %p126 = scmp.eq.s32.totalorder %s33, 0
      %p127 = por %p125, %p126
      %p128 = scmp.ne.s32.totalorder %s114, %s115
      %p129 = scmp.eq.s32.totalorder %s34, 1
      %p130 = por %p128, %p129
      %p132 = scmp.ne.s32.totalorder %s115, %s131
      %p133 = scmp.eq.s32.totalorder %s34, 0
      %p134 = por %p132, %p133
      %s135 = ssub.s32 %s28, %s35
      %p136 = scmp.eq.s32.totalorder %s135, 0
      %s138 = sadd.s32 %s137, 1
      %s139 = scalar_select %p136, %s137, %s138
      %p142 = pneg %p136
      %p143 = scmp.eq.s32.totalorder %s28, 1
      %p144 = por %p142, %p143
      %p145 = scmp.ne.s32.totalorder %s137, %s140
      %p146 = scmp.eq.s32.totalorder %s28, 0
      %p147 = por %p145, %p146
      %p148 = scmp.ne.s32.totalorder %s137, %s140
      %p149 = scmp.eq.s32.totalorder %s33, 1
      %p150 = por %p148, %p149
      %p151 = scmp.ne.s32.totalorder %s140, %s141
      %p152 = scmp.eq.s32.totalorder %s33, 0
      %p153 = por %p151, %p152
      %p154 = scmp.ne.s32.totalorder %s140, %s141
      %p155 = scmp.eq.s32.totalorder %s34, 1
      %p156 = por %p154, %p155
      %p158 = scmp.ne.s32.totalorder %s141, %s157
      %p159 = scmp.eq.s32.totalorder %s34, 0
      %p160 = por %p158, %p159
      %s161 = ssub.s32 %s28, %s35
      %p162 = scmp.eq.s32.totalorder %s161, 0
      %s164 = sadd.s32 %s163, 1
      %s165 = scalar_select %p162, %s163, %s164
      %p168 = pneg %p162
      %p169 = scmp.eq.s32.totalorder %s28, 1
      %p170 = por %p168, %p169
      %p171 = scmp.ne.s32.totalorder %s163, %s166
      %p172 = scmp.eq.s32.totalorder %s28, 0
      %p173 = por %p171, %p172
      %p174 = scmp.ne.s32.totalorder %s163, %s166
      %p175 = scmp.eq.s32.totalorder %s33, 1
      %p176 = por %p174, %p175
      %p177 = scmp.ne.s32.totalorder %s166, %s167
      %p178 = scmp.eq.s32.totalorder %s33, 0
      %p179 = por %p177, %p178
      %p180 = scmp.ne.s32.totalorder %s166, %s167
      %p181 = scmp.eq.s32.totalorder %s34, 1
      %p182 = por %p180, %p181
      %p184 = scmp.ne.s32.totalorder %s167, %s183
      %p185 = scmp.eq.s32.totalorder %s34, 0
      %p186 = por %p184, %p185
      %s187 = ssub.s32 %s28, %s35
      %p188 = scmp.eq.s32.totalorder %s187, 0
      %s190 = sadd.s32 %s189, 1
      %s191 = scalar_select %p188, %s189, %s190
      %p194 = pneg %p188
      %p195 = scmp.eq.s32.totalorder %s28, 1
      %p196 = por %p194, %p195
      %p197 = scmp.ne.s32.totalorder %s189, %s192
      %p198 = scmp.eq.s32.totalorder %s28, 0
      %p199 = por %p197, %p198
      %p200 = scmp.ne.s32.totalorder %s189, %s192
      %p201 = scmp.eq.s32.totalorder %s33, 1
      %p202 = por %p200, %p201
      %p203 = scmp.ne.s32.totalorder %s192, %s193
      %p204 = scmp.eq.s32.totalorder %s33, 0
      %p205 = por %p203, %p204
      %p206 = scmp.ne.s32.totalorder %s192, %s193
      %p207 = scmp.eq.s32.totalorder %s34, 1
      %p208 = por %p206, %p207
      %p210 = scmp.ne.s32.totalorder %s193, %s209
      %p211 = scmp.eq.s32.totalorder %s34, 0
      %p212 = por %p210, %p211
      %s213 = ssub.s32 %s28, %s35
      %p214 = scmp.eq.s32.totalorder %s213, 0
      %s216 = sadd.s32 %s215, 1
      %s217 = scalar_select %p214, %s215, %s216
      %p220 = pneg %p214
      %p221 = scmp.eq.s32.totalorder %s28, 1
      %p222 = por %p220, %p221
      %p223 = scmp.ne.s32.totalorder %s215, %s218
      %p224 = scmp.eq.s32.totalorder %s28, 0
      %p225 = por %p223, %p224
      %p226 = scmp.ne.s32.totalorder %s215, %s218
      %p227 = scmp.eq.s32.totalorder %s33, 1
      %p228 = por %p226, %p227
      %p229 = scmp.ne.s32.totalorder %s218, %s219
      %p230 = scmp.eq.s32.totalorder %s33, 0
      %p231 = por %p229, %p230
      %p232 = scmp.ne.s32.totalorder %s218, %s219
      %p233 = scmp.eq.s32.totalorder %s34, 1
      %p234 = por %p232, %p233
      %p236 = scmp.ne.s32.totalorder %s219, %s235
      %p237 = scmp.eq.s32.totalorder %s34, 0
      %p238 = por %p236, %p237
      %s239 = ssub.s32 %s28, %s35
      %p240 = scmp.eq.s32.totalorder %s239, 0
      %s242 = sadd.s32 %s241, 1
      %s243 = scalar_select %p240, %s241, %s242
      %p246 = pneg %p240
      %p247 = scmp.eq.s32.totalorder %s28, 1
      %p248 = por %p246, %p247
      %p249 = scmp.ne.s32.totalorder %s241, %s244
      %p250 = scmp.eq.s32.totalorder %s28, 0
      %p251 = por %p249, %p250
      %p252 = scmp.ne.s32.totalorder %s241, %s244
      %p253 = scmp.eq.s32.totalorder %s33, 1
      %p254 = por %p252, %p253
      %p255 = scmp.ne.s32.totalorder %s244, %s245
      %p256 = scmp.eq.s32.totalorder %s33, 0
      %p257 = por %p255, %p256
      %p258 = scmp.ne.s32.totalorder %s244, %s245
      %p259 = scmp.eq.s32.totalorder %s34, 1
      %p260 = por %p258, %p259
      %p262 = scmp.ne.s32.totalorder %s245, %s261
      %p263 = scmp.eq.s32.totalorder %s34, 0
      %p264 = por %p262, %p263
      %s265 = ssub.s32 %s28, %s35
      %p266 = scmp.eq.s32.totalorder %s265, 0
      %s268 = sadd.s32 %s267, 1
      %s269 = scalar_select %p266, %s267, %s268
      %p272 = pneg %p266
      %p273 = scmp.eq.s32.totalorder %s28, 1
      %p274 = por %p272, %p273
      %p275 = scmp.ne.s32.totalorder %s267, %s270
      %p276 = scmp.eq.s32.totalorder %s28, 0
      %p277 = por %p275, %p276
      %p278 = scmp.ne.s32.totalorder %s267, %s270
      %p279 = scmp.eq.s32.totalorder %s33, 1
      %p280 = por %p278, %p279
      %p281 = scmp.ne.s32.totalorder %s270, %s271
      %p282 = scmp.eq.s32.totalorder %s33, 0
      %p283 = por %p281, %p282
      %p284 = scmp.ne.s32.totalorder %s270, %s271
      %p285 = scmp.eq.s32.totalorder %s34, 1
      %p286 = por %p284, %p285
      %p288 = scmp.ne.s32.totalorder %s271, %s287
      %p289 = scmp.eq.s32.totalorder %s34, 0
      %p290 = por %p288, %p289
      %s291 = ssub.s32 %s28, %s35
      %p292 = scmp.eq.s32.totalorder %s291, 0
      %s294 = sadd.s32 %s293, 1
      %s295 = scalar_select %p292, %s293, %s294
      %p298 = pneg %p292
      %p299 = scmp.eq.s32.totalorder %s28, 1
      %p300 = por %p298, %p299
      %p301 = scmp.ne.s32.totalorder %s293, %s296
      %p302 = scmp.eq.s32.totalorder %s28, 0
      %p303 = por %p301, %p302
      %p304 = scmp.ne.s32.totalorder %s293, %s296
      %p305 = scmp.eq.s32.totalorder %s33, 1
      %p306 = por %p304, %p305
      %p307 = scmp.ne.s32.totalorder %s296, %s297
      %p308 = scmp.eq.s32.totalorder %s33, 0
      %p309 = por %p307, %p308
      %p310 = scmp.ne.s32.totalorder %s296, %s297
      %p311 = scmp.eq.s32.totalorder %s34, 1
      %p312 = por %p310, %p311
      %p314 = scmp.ne.s32.totalorder %s297, %s313
      %p315 = scmp.eq.s32.totalorder %s34, 0
      %p316 = por %p314, %p315
      %s317 = ssub.s32 %s28, %s35
      %p318 = scmp.eq.s32.totalorder %s317, 0
      %s320 = sadd.s32 %s319, 1
      %s321 = scalar_select %p318, %s319, %s320
      %p324 = pneg %p318
      %p325 = scmp.eq.s32.totalorder %s28, 1
      %p326 = por %p324, %p325
      %p327 = scmp.ne.s32.totalorder %s319, %s322
      %p328 = scmp.eq.s32.totalorder %s28, 0
      %p329 = por %p327, %p328
      %p330 = scmp.ne.s32.totalorder %s319, %s322
      %p331 = scmp.eq.s32.totalorder %s33, 1
      %p332 = por %p330, %p331
      %p333 = scmp.ne.s32.totalorder %s322, %s323
      %p334 = scmp.eq.s32.totalorder %s33, 0
      %p335 = por %p333, %p334
      %p336 = scmp.ne.s32.totalorder %s322, %s323
      %p337 = scmp.eq.s32.totalorder %s34, 1
      %p338 = por %p336, %p337
      %p340 = scmp.ne.s32.totalorder %s323, %s339
      %p341 = scmp.eq.s32.totalorder %s34, 0
      %p342 = por %p340, %p341
      %s343 = ssub.s32 %s28, %s35
      %p344 = scmp.eq.s32.totalorder %s343, 0
      %s346 = sadd.s32 %s345, 1
      %s347 = scalar_select %p344, %s345, %s346
      %p350 = pneg %p344
      %p351 = scmp.eq.s32.totalorder %s28, 1
      %p352 = por %p350, %p351
      %p353 = scmp.ne.s32.totalorder %s345, %s348
      %p354 = scmp.eq.s32.totalorder %s28, 0
      %p355 = por %p353, %p354
      %p356 = scmp.ne.s32.totalorder %s345, %s348
      %p357 = scmp.eq.s32.totalorder %s33, 1
      %p358 = por %p356, %p357
      %p359 = scmp.ne.s32.totalorder %s348, %s349
      %p360 = scmp.eq.s32.totalorder %s33, 0
      %p361 = por %p359, %p360
      %p362 = scmp.ne.s32.totalorder %s348, %s349
      %p363 = scmp.eq.s32.totalorder %s34, 1
      %p364 = por %p362, %p363
      %p366 = scmp.ne.s32.totalorder %s349, %s365
      %p367 = scmp.eq.s32.totalorder %s34, 0
      %p368 = por %p366, %p367
      %s369 = ssub.s32 %s28, %s35
      %p370 = scmp.eq.s32.totalorder %s369, 0
      %s372 = sadd.s32 %s371, 1
      %s373 = scalar_select %p370, %s371, %s372
      %p376 = pneg %p370
      %p377 = scmp.eq.s32.totalorder %s28, 1
      %p378 = por %p376, %p377
      %p379 = scmp.ne.s32.totalorder %s371, %s374
      %p380 = scmp.eq.s32.totalorder %s28, 0
      %p381 = por %p379, %p380
      %p382 = scmp.ne.s32.totalorder %s371, %s374
      %p383 = scmp.eq.s32.totalorder %s33, 1
      %p384 = por %p382, %p383
      %p385 = scmp.ne.s32.totalorder %s374, %s375
      %p386 = scmp.eq.s32.totalorder %s33, 0
      %p387 = por %p385, %p386
      %p388 = scmp.ne.s32.totalorder %s374, %s375
      %p389 = scmp.eq.s32.totalorder %s34, 1
      %p390 = por %p388, %p389
      %p392 = scmp.ne.s32.totalorder %s375, %s391
      %p393 = scmp.eq.s32.totalorder %s34, 0
      %p394 = por %p392, %p393
      %s395 = ssub.s32 %s28, %s35
      %p396 = scmp.eq.s32.totalorder %s395, 0
      %s398 = sadd.s32 %s397, 1
      %s399 = scalar_select %p396, %s397, %s398
      %p402 = pneg %p396
      %p403 = scmp.eq.s32.totalorder %s28, 1
      %p404 = por %p402, %p403
      %p405 = scmp.ne.s32.totalorder %s397, %s400
      %p406 = scmp.eq.s32.totalorder %s28, 0
      %p407 = por %p405, %p406
      %p408 = scmp.ne.s32.totalorder %s397, %s400
      %p409 = scmp.eq.s32.totalorder %s33, 1
      %p410 = por %p408, %p409
      %p411 = scmp.ne.s32.totalorder %s400, %s401
      %p412 = scmp.eq.s32.totalorder %s33, 0
      %p413 = por %p411, %p412
      %p414 = scmp.ne.s32.totalorder %s400, %s401
      %p415 = scmp.eq.s32.totalorder %s34, 1
      %p416 = por %p414, %p415
      %p418 = scmp.ne.s32.totalorder %s401, %s417
      %p419 = scmp.eq.s32.totalorder %s34, 0
      %p420 = por %p418, %p419
      %s421 = ssub.s32 %s28, %s35
      %p422 = scmp.eq.s32.totalorder %s421, 0
      %s424 = sadd.s32 %s423, 1
      %s425 = scalar_select %p422, %s423, %s424
      %p428 = pneg %p422
      %p429 = scmp.eq.s32.totalorder %s28, 1
      %p430 = por %p428, %p429
      %p431 = scmp.ne.s32.totalorder %s423, %s426
      %p432 = scmp.eq.s32.totalorder %s28, 0
      %p433 = por %p431, %p432
      %p434 = scmp.ne.s32.totalorder %s423, %s426
      %p435 = scmp.eq.s32.totalorder %s33, 1
      %p436 = por %p434, %p435
      %p437 = scmp.ne.s32.totalorder %s426, %s427
      %p438 = scmp.eq.s32.totalorder %s33, 0
      %p439 = por %p437, %p438
      %p440 = scmp.ne.s32.totalorder %s426, %s427
      %p441 = scmp.eq.s32.totalorder %s34, 1
      %p442 = por %p440, %p441
      %p444 = scmp.ne.s32.totalorder %s427, %s443
      %p445 = scmp.eq.s32.totalorder %s34, 0
      %p446 = por %p444, %p445
      %s447 = ssub.s32 %s28, %s35
      %p448 = scmp.eq.s32.totalorder %s447, 0
      %s450 = sadd.s32 %s449, 1
      %s451 = scalar_select %p448, %s449, %s450
      %p454 = pneg %p448
      %p455 = scmp.eq.s32.totalorder %s28, 1
      %p456 = por %p454, %p455
      %p457 = scmp.ne.s32.totalorder %s449, %s452
      %p458 = scmp.eq.s32.totalorder %s28, 0
      %p459 = por %p457, %p458
      %p460 = scmp.ne.s32.totalorder %s449, %s452
      %p461 = scmp.eq.s32.totalorder %s33, 1
      %p462 = por %p460, %p461
      %p463 = scmp.ne.s32.totalorder %s452, %s453
      %p464 = scmp.eq.s32.totalorder %s33, 0
      %p465 = por %p463, %p464
      %p466 = scmp.ne.s32.totalorder %s452, %s453
      %p467 = scmp.eq.s32.totalorder %s34, 1
      %p468 = por %p466, %p467
      %p470 = scmp.ne.s32.totalorder %s453, %s469
      %p471 = scmp.eq.s32.totalorder %s34, 0
      %p472 = por %p470, %p471
      %s474 = sadd.s32 %s473, 1
      %p477 = scmp.eq.s32.totalorder %s28, 1
      %p478 = scmp.ne.s32.totalorder %s473, %s475
      %p479 = scmp.eq.s32.totalorder %s28, 0
      %p480 = por %p478, %p479
      %p481 = scmp.ne.s32.totalorder %s473, %s475
      %p482 = scmp.eq.s32.totalorder %s33, 1
      %p483 = por %p481, %p482
      %p484 = scmp.ne.s32.totalorder %s475, %s476
      %p485 = scmp.eq.s32.totalorder %s33, 0
      %p486 = por %p484, %p485
      %p487 = scmp.ne.s32.totalorder %s475, %s476
      %p488 = scmp.eq.s32.totalorder %s34, 1
      %p489 = por %p487, %p488
      %p491 = scmp.ne.s32.totalorder %s476, %s490
      %p492 = scmp.eq.s32.totalorder %s34, 0
      %p493 = por %p491, %p492
      %p494 = scmp.le.s32.totalorder 1, %s28
      %p495 = scmp.lt.s32.totalorder %s28, 3
      %p496 = pnand %p494, %p495
      %p497 = pneg %p496
      // Predicated region
      $region9: #{tpu_custom_call.1} parent=5 // pred_check
        _
      $region10: #{tpu_custom_call.1} parent=5 // pred_check_branch
        %499 = sbr.rel (%p496) target = $region12
      $region11: #{tpu_custom_call.1} parent=5 // pred_region
        %s500 = ssub.s32 %s28, 1
        // Predicated region
        $region13: #{tpu_custom_call.1} parent=11 // pred_check
          %p501 = pneg %p49
        $region14: #{tpu_custom_call.1} parent=11 // pred_check_branch
          %503 = sbr.rel (%p501) target = $region16
        $region15: #{tpu_custom_call.1} parent=11 // pred_region
          %s505 = ssub.s32 256, 256
          %506 = vsyncadd [#allocation3], %s505
          %s507 = sshll.u32 [#allocation2], 4
          %s508 = int_to_ptr.vmem [resolvable:$true] %s507
          %513 = dma.hbm_to_vmem [thread:$0]  %s0, 256, %s508, [#allocation3], 128, 128, 8
        $region16: #{tpu_custom_call.1} parent=11 // pred_fallthru
          _
      $region12: #{tpu_custom_call.1} parent=5 // pred_fallthru
        _
      %p514 = scmp.lt.s32.totalorder %s28, 2
      // Predicated region
      $region17: #{tpu_custom_call.1} parent=5 // pred_check
        %p515 = pneg %p514
      $region18: #{tpu_custom_call.1} parent=5 // pred_check_branch
        %517 = sbr.rel (%p515) target = $region20
      $region19: #{tpu_custom_call.1} parent=5 // pred_region
        // Predicated region
        $region21: #{tpu_custom_call.1} parent=19 // pred_check
          %p518 = pneg %p69
        $region22: #{tpu_custom_call.1} parent=19 // pred_check_branch
          %520 = sbr.rel (%p518) target = $region24
        $region23: #{tpu_custom_call.1} parent=19 // pred_region
          %p521 = scmp.lt.s32.totalorder %s28, 1
          %s522 = scalar_select %p521, %s28, 1
          %s523 = smul.addr %s522, 4
          %s524 = smul.addr %s523, 4
          %s525 = scalar_lea.vmem %s1, %s524
        $region24: #{tpu_custom_call.1} parent=19 // pred_fallthru
          _
        // Predicated region
        $region25: #{tpu_custom_call.1} parent=19 // pred_check
          %p526 = pneg %p95
        $region26: #{tpu_custom_call.1} parent=19 // pred_check_branch
          %528 = sbr.rel (%p526) target = $region28
        $region27: #{tpu_custom_call.1} parent=19 // pred_region
          %p529 = scmp.lt.s32.totalorder %s28, 1
          %s530 = scalar_select %p529, %s28, 1
          %s531 = scalar_lea.vmem %s2, %s530
        $region28: #{tpu_custom_call.1} parent=19 // pred_fallthru
          _
        // Predicated region
        $region29: #{tpu_custom_call.1} parent=19 // pred_check
          %p532 = pneg %p121
        $region30: #{tpu_custom_call.1} parent=19 // pred_check_branch
          %534 = sbr.rel (%p532) target = $region32
        $region31: #{tpu_custom_call.1} parent=19 // pred_region
          %p535 = scmp.lt.s32.totalorder %s28, 1
          %s536 = scalar_select %p535, %s28, 1
          %s537 = smul.addr %s536, 4
          %s538 = smul.addr %s537, 4
          %s539 = scalar_lea.vmem %s3, %s538
        $region32: #{tpu_custom_call.1} parent=19 // pred_fallthru
          _
        // Predicated region
        $region33: #{tpu_custom_call.1} parent=19 // pred_check
          %p540 = pneg %p147
        $region34: #{tpu_custom_call.1} parent=19 // pred_check_branch
          %542 = sbr.rel (%p540) target = $region36
        $region35: #{tpu_custom_call.1} parent=19 // pred_region
          %p543 = scmp.lt.s32.totalorder %s28, 1
          %s544 = scalar_select %p543, %s28, 1
          %s545 = scalar_lea.vmem %s4, %s544
        $region36: #{tpu_custom_call.1} parent=19 // pred_fallthru
          _
        // Predicated region
        $region37: #{tpu_custom_call.1} parent=19 // pred_check
          %p546 = pneg %p173
        $region38: #{tpu_custom_call.1} parent=19 // pred_check_branch
          %548 = sbr.rel (%p546) target = $region40
        $region39: #{tpu_custom_call.1} parent=19 // pred_region
          %p549 = scmp.lt.s32.totalorder %s28, 1
          %s550 = scalar_select %p549, %s28, 1
          %s551 = smul.addr %s550, 4
          %s552 = smul.addr %s551, 4
          %s553 = scalar_lea.vmem %s5, %s552
        $region40: #{tpu_custom_call.1} parent=19 // pred_fallthru
          _
        // Predicated region
        $region41: #{tpu_custom_call.1} parent=19 // pred_check
          %p554 = pneg %p199
        $region42: #{tpu_custom_call.1} parent=19 // pred_check_branch
          %556 = sbr.rel (%p554) target = $region44
        $region43: #{tpu_custom_call.1} parent=19 // pred_region
          %p557 = scmp.lt.s32.totalorder %s28, 1
          %s558 = scalar_select %p557, %s28, 1
          %s559 = scalar_lea.vmem %s6, %s558
        $region44: #{tpu_custom_call.1} parent=19 // pred_fallthru
          _
        // Predicated region
        $region45: #{tpu_custom_call.1} parent=19 // pred_check
          %p560 = pneg %p225
        $region46: #{tpu_custom_call.1} parent=19 // pred_check_branch
          %562 = sbr.rel (%p560) target = $region48
        $region47: #{tpu_custom_call.1} parent=19 // pred_region
          %s563 = sand.u32 %s28, 1
          %s564 = scalar_lea.sflag [#allocation6], %s563
          %s565 = sand.u32 %s215, 1
          %s566 = smul.addr %s565, 16
          %s567 = scalar_lea.vmem [#allocation5], %s566
          %s569 = ssub.s32 256, 256
          %570 = vsyncadd %s564, %s569
          %s571 = smul.addr %s28, 4
          %s572 = smul.addr %s571, 64
          %s573 = scalar_lea.hbm %s7, %s572
          %s574 = sshll.u32 %s567, 4
          %s575 = int_to_ptr.vmem [resolvable:$true] %s574
          %580 = dma.hbm_to_vmem [thread:$0]  %s573, 256, %s575, %s564, 64, 64, 4
        $region48: #{tpu_custom_call.1} parent=19 // pred_fallthru
          _
        // Predicated region
        $region49: #{tpu_custom_call.1} parent=19 // pred_check
          %p581 = pneg %p251
        $region50: #{tpu_custom_call.1} parent=19 // pred_check_branch
          %583 = sbr.rel (%p581) target = $region52
        $region51: #{tpu_custom_call.1} parent=19 // pred_region
          %p584 = scmp.lt.s32.totalorder %s28, 1
          %s585 = scalar_select %p584, %s28, 1
          %s586 = scalar_lea.vmem %s8, %s585
        $region52: #{tpu_custom_call.1} parent=19 // pred_fallthru
          _
        // Predicated region
        $region53: #{tpu_custom_call.1} parent=19 // pred_check
          %p587 = pneg %p277
        $region54: #{tpu_custom_call.1} parent=19 // pred_check_branch
          %589 = sbr.rel (%p587) target = $region56
        $region55: #{tpu_custom_call.1} parent=19 // pred_region
          %p590 = scmp.lt.s32.totalorder %s28, 1
          %s591 = scalar_select %p590, %s28, 1
          %s592 = scalar_lea.vmem %s9, %s591
        $region56: #{tpu_custom_call.1} parent=19 // pred_fallthru
          _
        // Predicated region
        $region57: #{tpu_custom_call.1} parent=19 // pred_check
          %p593 = pneg %p303
        $region58: #{tpu_custom_call.1} parent=19 // pred_check_branch
          %595 = sbr.rel (%p593) target = $region60
        $region59: #{tpu_custom_call.1} parent=19 // pred_region
          %p596 = scmp.lt.s32.totalorder %s28, 1
          %s597 = scalar_select %p596, %s28, 1
          %s598 = scalar_lea.vmem %s10, %s597
        $region60: #{tpu_custom_call.1} parent=19 // pred_fallthru
          _
        // Predicated region
        $region61: #{tpu_custom_call.1} parent=19 // pred_check
          %p599 = pneg %p329
        $region62: #{tpu_custom_call.1} parent=19 // pred_check_branch
          %601 = sbr.rel (%p599) target = $region64
        $region63: #{tpu_custom_call.1} parent=19 // pred_region
          %s602 = sand.u32 %s28, 1
          %s603 = scalar_lea.sflag [#allocation6], %s602
          %s604 = sand.u32 %s319, 1
          %s605 = smul.addr %s604, 16
          %s606 = scalar_lea.vmem [#allocation7], %s605
          %s608 = ssub.s32 256, 256
          %609 = vsyncadd %s603, %s608
          %s610 = smul.addr %s28, 4
          %s611 = smul.addr %s610, 64
          %s612 = scalar_lea.hbm %s11, %s611
          %s613 = sshll.u32 %s606, 4
          %s614 = int_to_ptr.vmem [resolvable:$true] %s613
          %619 = dma.hbm_to_vmem [thread:$0]  %s612, 256, %s614, %s603, 64, 64, 4
        $region64: #{tpu_custom_call.1} parent=19 // pred_fallthru
          _
        // Predicated region
        $region65: #{tpu_custom_call.1} parent=19 // pred_check
          %p620 = pneg %p355
        $region66: #{tpu_custom_call.1} parent=19 // pred_check_branch
          %622 = sbr.rel (%p620) target = $region68
        $region67: #{tpu_custom_call.1} parent=19 // pred_region
          %p623 = scmp.lt.s32.totalorder %s28, 1
          %s624 = scalar_select %p623, %s28, 1
          %s625 = scalar_lea.vmem %s12, %s624
        $region68: #{tpu_custom_call.1} parent=19 // pred_fallthru
          _
        // Predicated region
        $region69: #{tpu_custom_call.1} parent=19 // pred_check
          %p626 = pneg %p381
        $region70: #{tpu_custom_call.1} parent=19 // pred_check_branch
          %628 = sbr.rel (%p626) target = $region72
        $region71: #{tpu_custom_call.1} parent=19 // pred_region
          %p629 = scmp.lt.s32.totalorder %s28, 1
          %s630 = scalar_select %p629, %s28, 1
          %s631 = smul.addr %s630, 8
          %s632 = smul.addr %s631, 4
          %s633 = scalar_lea.vmem %s13, %s632
        $region72: #{tpu_custom_call.1} parent=19 // pred_fallthru
          _
        // Predicated region
        $region73: #{tpu_custom_call.1} parent=19 // pred_check
          %p634 = pneg %p407
        $region74: #{tpu_custom_call.1} parent=19 // pred_check_branch
          %636 = sbr.rel (%p634) target = $region76
        $region75: #{tpu_custom_call.1} parent=19 // pred_region
          %p637 = scmp.lt.s32.totalorder %s28, 1
          %s638 = scalar_select %p637, %s28, 1
          %s639 = scalar_lea.vmem %s14, %s638
        $region76: #{tpu_custom_call.1} parent=19 // pred_fallthru
          _
        // Predicated region
        $region77: #{tpu_custom_call.1} parent=19 // pred_check
          %p640 = pneg %p433
        $region78: #{tpu_custom_call.1} parent=19 // pred_check_branch
          %642 = sbr.rel (%p640) target = $region80
        $region79: #{tpu_custom_call.1} parent=19 // pred_region
          %p643 = scmp.lt.s32.totalorder %s28, 1
          %s644 = scalar_select %p643, %s28, 1
          %s645 = scalar_lea.vmem %s15, %s644
        $region80: #{tpu_custom_call.1} parent=19 // pred_fallthru
          _
        // Predicated region
        $region81: #{tpu_custom_call.1} parent=19 // pred_check
          %p646 = pneg %p459
        $region82: #{tpu_custom_call.1} parent=19 // pred_check_branch
          %648 = sbr.rel (%p646) target = $region84
        $region83: #{tpu_custom_call.1} parent=19 // pred_region
          %p649 = scmp.lt.s32.totalorder %s28, 1
          %s650 = scalar_select %p649, %s28, 1
          %s651 = scalar_lea.vmem %s16, %s650
        $region84: #{tpu_custom_call.1} parent=19 // pred_fallthru
          _
      $region20: #{tpu_custom_call.1} parent=5 // pred_fallthru
        _
      %p652 = scmp.le.s32.totalorder 1, %s28
      %p653 = scmp.lt.s32.totalorder %s28, 3
      %p654 = pnand %p652, %p653
      %p655 = pneg %p654
      // Predicated region
      $region85: #{tpu_custom_call.1} parent=5 // pred_check
        _
      $region86: #{tpu_custom_call.1} parent=5 // pred_check_branch
        %657 = sbr.rel (%p654) target = $region88
      $region87: #{tpu_custom_call.1} parent=5 // pred_region
        %s658 = ssub.s32 %s28, 1
        // Predicated region
        $region89: #{tpu_custom_call.1} parent=87 // pred_check
          %p659 = pneg %p49
        $region90: #{tpu_custom_call.1} parent=87 // pred_check_branch
          %661 = sbr.rel (%p659) target = $region92
        $region91: #{tpu_custom_call.1} parent=87 // pred_region
          %662 = dma.done [#allocation3], 256
        $region92: #{tpu_custom_call.1} parent=87 // pred_fallthru
          _
        %s663 = sand.u32 %s33, 1
        %s664 = scalar_lea.sflag [#allocation6], %s663
        %s665 = sand.u32 %s218, 1
        %s666 = smul.addr %s665, 16
        %s667 = scalar_lea.vmem [#allocation5], %s666
        // Predicated region
        $region93: #{tpu_custom_call.1} parent=87 // pred_check
          %p668 = pneg %p231
        $region94: #{tpu_custom_call.1} parent=87 // pred_check_branch
          %670 = sbr.rel (%p668) target = $region96
        $region95: #{tpu_custom_call.1} parent=87 // pred_region
          %671 = dma.done %s664, 256
        $region96: #{tpu_custom_call.1} parent=87 // pred_fallthru
          _
        %s672 = sand.u32 %s33, 1
        %s673 = scalar_lea.sflag [#allocation6], %s672
        %s674 = sand.u32 %s322, 1
        %s675 = smul.addr %s674, 16
        %s676 = scalar_lea.vmem [#allocation7], %s675
        // Predicated region
        $region97: #{tpu_custom_call.1} parent=87 // pred_check
          %p677 = pneg %p335
        $region98: #{tpu_custom_call.1} parent=87 // pred_check_branch
          %679 = sbr.rel (%p677) target = $region100
        $region99: #{tpu_custom_call.1} parent=87 // pred_region
          %680 = dma.done %s673, 256
        $region100: #{tpu_custom_call.1} parent=87 // pred_fallthru
          _
        %p681 = pneg %p49
        %p682 = pneg %p46
        %p683 = scmp.lt.s32.totalorder %s33, 1
        %s684 = scalar_select %p683, %s33, 1
        %s685 = smul.addr %s684, 4
        %s686 = smul.addr %s685, 4
        %s687 = scalar_lea.vmem %s1, %s686
        %p688 = pneg %p75
        %p689 = pneg %p72
        %p690 = scmp.lt.s32.totalorder %s33, 1
        %s691 = scalar_select %p690, %s33, 1
        %s692 = scalar_lea.vmem %s2, %s691
        %p693 = pneg %p101
        %p694 = pneg %p98
        %p695 = scmp.lt.s32.totalorder %s33, 1
        %s696 = scalar_select %p695, %s33, 1
        %s697 = smul.addr %s696, 4
        %s698 = smul.addr %s697, 4
        %s699 = scalar_lea.vmem %s3, %s698
        %p700 = pneg %p127
        %p701 = pneg %p124
        %p702 = scmp.lt.s32.totalorder %s33, 1
        %s703 = scalar_select %p702, %s33, 1
        %s704 = scalar_lea.vmem %s4, %s703
        %p705 = pneg %p153
        %p706 = pneg %p150
        %p707 = scmp.lt.s32.totalorder %s33, 1
        %s708 = scalar_select %p707, %s33, 1
        %s709 = smul.addr %s708, 4
        %s710 = smul.addr %s709, 4
        %s711 = scalar_lea.vmem %s5, %s710
        %p712 = pneg %p179
        %p713 = pneg %p176
        %p714 = scmp.lt.s32.totalorder %s33, 1
        %s715 = scalar_select %p714, %s33, 1
        %s716 = scalar_lea.vmem %s6, %s715
        %p717 = pneg %p205
        %p718 = pneg %p202
        %s719 = sand.u32 %s33, 1
        %s720 = scalar_lea.sflag [#allocation6], %s719
        %s721 = sand.u32 %s218, 1
        %s722 = smul.addr %s721, 16
        %s723 = scalar_lea.vmem [#allocation5], %s722
        %p724 = pneg %p231
        %p725 = pneg %p228
        %p726 = scmp.lt.s32.totalorder %s33, 1
        %s727 = scalar_select %p726, %s33, 1
        %s728 = scalar_lea.vmem %s8, %s727
        %p729 = pneg %p257
        %p730 = pneg %p254
        %p731 = scmp.lt.s32.totalorder %s33, 1
        %s732 = scalar_select %p731, %s33, 1
        %s733 = scalar_lea.vmem %s9, %s732
        %p734 = pneg %p283
        %p735 = pneg %p280
        %p736 = scmp.lt.s32.totalorder %s33, 1
        %s737 = scalar_select %p736, %s33, 1
        %s738 = scalar_lea.vmem %s10, %s737
        %p739 = pneg %p309
        %p740 = pneg %p306
        %s741 = sand.u32 %s33, 1
        %s742 = scalar_lea.sflag [#allocation6], %s741
        %s743 = sand.u32 %s322, 1
        %s744 = smul.addr %s743, 16
        %s745 = scalar_lea.vmem [#allocation7], %s744
        %p746 = pneg %p335
        %p747 = pneg %p332
        %p748 = scmp.lt.s32.totalorder %s33, 1
        %s749 = scalar_select %p748, %s33, 1
        %s750 = scalar_lea.vmem %s12, %s749
        %p751 = pneg %p361
        %p752 = pneg %p358
        %p753 = scmp.lt.s32.totalorder %s33, 1
        %s754 = scalar_select %p753, %s33, 1
        %s755 = smul.addr %s754, 8
        %s756 = smul.addr %s755, 4
        %s757 = scalar_lea.vmem %s13, %s756
        %p758 = pneg %p387
        %p759 = pneg %p384
        %p760 = scmp.lt.s32.totalorder %s33, 1
        %s761 = scalar_select %p760, %s33, 1
        %s762 = scalar_lea.vmem %s14, %s761
        %p763 = pneg %p413
        %p764 = pneg %p410
        %p765 = scmp.lt.s32.totalorder %s33, 1
        %s766 = scalar_select %p765, %s33, 1
        %s767 = scalar_lea.vmem %s15, %s766
        %p768 = pneg %p439
        %p769 = pneg %p436
        %p770 = scmp.lt.s32.totalorder %s33, 1
        %s771 = scalar_select %p770, %s33, 1
        %s772 = scalar_lea.vmem %s16, %s771
        %p773 = pneg %p465
        %p774 = pneg %p462
        %p775 = pneg %p486
        %p776 = pneg %p483
        %p777 = scmp.lt.s32.totalorder %s33, 1
        %s778 = scalar_select %p777, %s33, 1
        %s779 = smul.addr %s778, 4
        %s780 = smul.addr %s779, 4
        %s781 = scalar_lea.vmem %s1, %s780
        %p782 = scmp.lt.s32.totalorder %s33, 1
        %s783 = scalar_select %p782, %s33, 1
        %s784 = scalar_lea.vmem %s2, %s783
        %p785 = scmp.lt.s32.totalorder %s33, 1
        %s786 = scalar_select %p785, %s33, 1
        %s787 = smul.addr %s786, 4
        %s788 = smul.addr %s787, 4
        %s789 = scalar_lea.vmem %s3, %s788
        %p790 = scmp.lt.s32.totalorder %s33, 1
        %s791 = scalar_select %p790, %s33, 1
        %s792 = scalar_lea.vmem %s4, %s791
        %p793 = scmp.lt.s32.totalorder %s33, 1
        %s794 = scalar_select %p793, %s33, 1
        %s795 = smul.addr %s794, 4
        %s796 = smul.addr %s795, 4
        %s797 = scalar_lea.vmem %s5, %s796
        %p798 = scmp.lt.s32.totalorder %s33, 1
        %s799 = scalar_select %p798, %s33, 1
        %s800 = scalar_lea.vmem %s6, %s799
        %p801 = scmp.lt.s32.totalorder %s33, 1
        %s802 = scalar_select %p801, %s33, 1
        %s803 = scalar_lea.vmem %s8, %s802
        %p804 = scmp.lt.s32.totalorder %s33, 1
        %s805 = scalar_select %p804, %s33, 1
        %s806 = scalar_lea.vmem %s9, %s805
        %p807 = scmp.lt.s32.totalorder %s33, 1
        %s808 = scalar_select %p807, %s33, 1
        %s809 = scalar_lea.vmem %s10, %s808
        %p810 = scmp.lt.s32.totalorder %s33, 1
        %s811 = scalar_select %p810, %s33, 1
        %s812 = scalar_lea.vmem %s12, %s811
        %p813 = scmp.lt.s32.totalorder %s33, 1
        %s814 = scalar_select %p813, %s33, 1
        %s815 = smul.addr %s814, 8
        %s816 = smul.addr %s815, 4
        %s817 = scalar_lea.vmem %s13, %s816
        %p818 = scmp.lt.s32.totalorder %s33, 1
        %s819 = scalar_select %p818, %s33, 1
        %s820 = scalar_lea.vmem %s14, %s819
        %p821 = scmp.lt.s32.totalorder %s33, 1
        %s822 = scalar_select %p821, %s33, 1
        %s823 = scalar_lea.vmem %s15, %s822
        %p824 = scmp.lt.s32.totalorder %s33, 1
        %s825 = scalar_select %p824, %s33, 1
        %s826 = scalar_lea.vmem %s16, %s825
        %p828 = scmp.eq.s32.totalorder %s33, 0
        // Predicated region
        $region101: #{tpu_custom_call.1} parent=87 // pred_check
          %p829 = pneg %p828
        $region102: #{tpu_custom_call.1} parent=87 // pred_check_branch
          %831 = sbr.rel (%p829) target = $region104
        $region103: #{tpu_custom_call.1} parent=87 // pred_region
          %v832 = vld [vmem:[#allocation2] sm:$0xff]
          %v833 = vld [vmem:[#allocation2 + $0x8] sm:$0xff]
          %vm834 = vcmask 261120
          %835 = vst.msk [vmem:[#allocation8] sm:$0xff] %vm834, %v832
          %836 = vst.msk [vmem:[#allocation8 + $0x8] sm:$0xff] %vm834, %v833
        $region104: #{tpu_custom_call.1} parent=87 // pred_fallthru
          _
        %v837 = vld [vmem:[#allocation8] sm:$0xff]
        %v838 = vld [vmem:[#allocation8 + $0x8] sm:$0xff]
        %v839 = vpack.c.bf16 %v838, %v837
        %v840 = vld [vmem:[%s781] sm:$0xf]
        %v841 = vld [vmem:[%s781 + $0x4] sm:$0xf]
        %v842 = vld [vmem:[%s781 + $0x8] sm:$0xf]
        %v843 = vld [vmem:[%s781 + $0xc] sm:$0xf]
        %v844 = vld [vmem:[%s784] sm:$0x1]
        %v846 = vlaneseq
        %v847 = vshrl.u32 %v846, 7
        %v848 = vsub.s32 0, %v847
        %v849 = vrot.slane %v844, %v848
        %v855 = vunpack.c.l.b16 %v840
        %v856 = vunpack.c.l.b16 %v841
        %v857 = vunpack.c.l.b16 %v842
        %v858 = vunpack.c.l.b16 %v843
        %v859 = vpack.c.b16 %v856, %v855
        %v860 = vpack.c.b16 %v858, %v857
        %vm863 = vcmask 261120
        %v865 = vsel %vm863, %v839, 0
        %867 = vmatprep.subr.bf16.mxu0 0
        %868 = vmatpush1.bf16.msra.mxu0 0
        %869 = vmatprep.subr.bf16.mxu0 0
        %870 = vmatpush1.bf16.msra.mxu0 0
        %871 = vmatprep.subr.bf16.mxu0 0
        %872 = vmatpush1.bf16.msra.mxu0 0
        %873 = vmatprep.subr.bf16.mxu0 0
        %874 = vmatpush1.bf16.msra.mxu0 0
        %875 = vmatprep.subr.bf16.mxu0 0
        %876 = vmatpush1.bf16.msra.mxu0 0
        %877 = vmatprep.subr.bf16.mxu0 0
        %878 = vmatpush1.bf16.msra.mxu0 0
        %879 = vmatprep.subr.bf16.mxu0 0
        %880 = vmatpush1.bf16.msra.mxu0 %v860
        %881 = vmatprep.subr.bf16.mxu0 0
        %882 = vmatpush1.bf16.msra.mxu0 %v859
        %883 = vmatprep.subr.bf16.mxu0 0
        %884 = vmatpush2.bf16.msra.mxu0 0
        %885 = vmatprep.subr.bf16.mxu0 0
        %886 = vmatpush2.bf16.msra.mxu0 0
        %887 = vmatprep.subr.bf16.mxu0 0
        %888 = vmatpush2.bf16.msra.mxu0 0
        %889 = vmatprep.subr.bf16.mxu0 0
        %890 = vmatpush2.bf16.msra.mxu0 0
        %891 = vmatprep.subr.bf16.mxu0 0
        %892 = vmatpush2.bf16.msra.mxu0 0
        %893 = vmatprep.subr.bf16.mxu0 0
        %894 = vmatpush2.bf16.msra.mxu0 0
        %895 = vmatprep.subr.bf16.mxu0 0
        %896 = vmatpush2.bf16.msra.mxu0 0
        %897 = vmatprep.subr.bf16.mxu0 0
        %898 = vmatpush2.bf16.msra.mxu0 0
        %899 = vmatprep.mubr.bf16.mxu0 0
        %900 = vmatmul.mubr.bf16.gmra.mxu0 %v865
        %v901 = vpop.f32.mrf.mxu0
        %v902 = vadd.f32 %v849, %v901
        %v903 = vpop.f32.mrf.mxu0
        %v904 = vpop.f32.mrf.mxu0
        %v905 = vadd.f32 %v849, %v904
        %v906 = vpop.f32.mrf.mxu0
        %907 = vdwg.mxu0
        %v908 = vld [vmem:[%s789] sm:$0xf]
        %v909 = vld [vmem:[%s789 + $0x4] sm:$0xf]
        %v910 = vld [vmem:[%s789 + $0x8] sm:$0xf]
        %v911 = vld [vmem:[%s789 + $0xc] sm:$0xf]
        %v912 = vld [vmem:[%s792] sm:$0x1]
        %v914 = vlaneseq
        %v915 = vshrl.u32 %v914, 7
        %v916 = vsub.s32 0, %v915
        %v917 = vrot.slane %v912, %v916
        %v923 = vunpack.c.l.b16 %v908
        %v924 = vunpack.c.l.b16 %v909
        %v925 = vunpack.c.l.b16 %v910
        %v926 = vunpack.c.l.b16 %v911
        %v927 = vpack.c.b16 %v924, %v923
        %v928 = vpack.c.b16 %v926, %v925
        %931 = vmatprep.subr.bf16.mxu0 0
        %932 = vmatpush1.bf16.msra.mxu0 0
        %933 = vmatprep.subr.bf16.mxu0 0
        %934 = vmatpush1.bf16.msra.mxu0 0
        %935 = vmatprep.subr.bf16.mxu0 0
        %936 = vmatpush1.bf16.msra.mxu0 0
        %937 = vmatprep.subr.bf16.mxu0 0
        %938 = vmatpush1.bf16.msra.mxu0 0
        %939 = vmatprep.subr.bf16.mxu0 0
        %940 = vmatpush1.bf16.msra.mxu0 0
        %941 = vmatprep.subr.bf16.mxu0 0
        %942 = vmatpush1.bf16.msra.mxu0 0
        %943 = vmatprep.subr.bf16.mxu0 0
        %944 = vmatpush1.bf16.msra.mxu0 %v928
        %945 = vmatprep.subr.bf16.mxu0 0
        %946 = vmatpush1.bf16.msra.mxu0 %v927
        %947 = vmatprep.subr.bf16.mxu0 0
        %948 = vmatpush2.bf16.msra.mxu0 0
        %949 = vmatprep.subr.bf16.mxu0 0
        %950 = vmatpush2.bf16.msra.mxu0 0
        %951 = vmatprep.subr.bf16.mxu0 0
        %952 = vmatpush2.bf16.msra.mxu0 0
        %953 = vmatprep.subr.bf16.mxu0 0
        %954 = vmatpush2.bf16.msra.mxu0 0
        %955 = vmatprep.subr.bf16.mxu0 0
        %956 = vmatpush2.bf16.msra.mxu0 0
        %957 = vmatprep.subr.bf16.mxu0 0
        %958 = vmatpush2.bf16.msra.mxu0 0
        %959 = vmatprep.subr.bf16.mxu0 0
        %960 = vmatpush2.bf16.msra.mxu0 0
        %961 = vmatprep.subr.bf16.mxu0 0
        %962 = vmatpush2.bf16.msra.mxu0 0
        %963 = vmatprep.mubr.bf16.mxu0 0
        %964 = vmatmul.mubr.bf16.gmra.mxu0 %v865
        %v965 = vpop.f32.mrf.mxu0
        %v966 = vadd.f32 %v917, %v965
        %v967 = vpop.f32.mrf.mxu0
        %v968 = vpop.f32.mrf.mxu0
        %v969 = vadd.f32 %v917, %v968
        %v970 = vpop.f32.mrf.mxu0
        %971 = vdwg.mxu0
        %v972 = vld [vmem:[%s797] sm:$0xf]
        %v973 = vld [vmem:[%s797 + $0x4] sm:$0xf]
        %v974 = vld [vmem:[%s797 + $0x8] sm:$0xf]
        %v975 = vld [vmem:[%s797 + $0xc] sm:$0xf]
        %v976 = vld [vmem:[%s800] sm:$0x1]
        %v978 = vlaneseq
        %v979 = vshrl.u32 %v978, 7
        %v980 = vsub.s32 0, %v979
        %v981 = vrot.slane %v976, %v980
        %v987 = vunpack.c.l.b16 %v972
        %v988 = vunpack.c.l.b16 %v973
        %v989 = vunpack.c.l.b16 %v974
        %v990 = vunpack.c.l.b16 %v975
        %v991 = vpack.c.b16 %v988, %v987
        %v992 = vpack.c.b16 %v990, %v989
        %995 = vmatprep.subr.bf16.mxu0 0
        %996 = vmatpush1.bf16.msra.mxu0 0
        %997 = vmatprep.subr.bf16.mxu0 0
        %998 = vmatpush1.bf16.msra.mxu0 0
        %999 = vmatprep.subr.bf16.mxu0 0
        %1000 = vmatpush1.bf16.msra.mxu0 0
        %1001 = vmatprep.subr.bf16.mxu0 0
        %1002 = vmatpush1.bf16.msra.mxu0 0
        %1003 = vmatprep.subr.bf16.mxu0 0
        %1004 = vmatpush1.bf16.msra.mxu0 0
        %1005 = vmatprep.subr.bf16.mxu0 0
        %1006 = vmatpush1.bf16.msra.mxu0 0
        %1007 = vmatprep.subr.bf16.mxu0 0
        %1008 = vmatpush1.bf16.msra.mxu0 %v992
        %1009 = vmatprep.subr.bf16.mxu0 0
        %1010 = vmatpush1.bf16.msra.mxu0 %v991
        %1011 = vmatprep.subr.bf16.mxu0 0
        %1012 = vmatpush2.bf16.msra.mxu0 0
        %1013 = vmatprep.subr.bf16.mxu0 0
        %1014 = vmatpush2.bf16.msra.mxu0 0
        %1015 = vmatprep.subr.bf16.mxu0 0
        %1016 = vmatpush2.bf16.msra.mxu0 0
        %1017 = vmatprep.subr.bf16.mxu0 0
        %1018 = vmatpush2.bf16.msra.mxu0 0
        %1019 = vmatprep.subr.bf16.mxu0 0
        %1020 = vmatpush2.bf16.msra.mxu0 0
        %1021 = vmatprep.subr.bf16.mxu0 0
        %1022 = vmatpush2.bf16.msra.mxu0 0
        %1023 = vmatprep.subr.bf16.mxu0 0
        %1024 = vmatpush2.bf16.msra.mxu0 0
        %1025 = vmatprep.subr.bf16.mxu0 0
        %1026 = vmatpush2.bf16.msra.mxu0 0
        %1027 = vmatprep.mubr.bf16.mxu0 0
        %1028 = vmatmul.mubr.bf16.gmra.mxu0 %v865
        %v1029 = vpop.f32.mrf.mxu0
        %v1030 = vadd.f32 %v981, %v1029
        %v1031 = vpop.f32.mrf.mxu0
        %v1032 = vpop.f32.mrf.mxu0
        %v1033 = vadd.f32 %v981, %v1032
        %v1034 = vpop.f32.mrf.mxu0
        %1035 = vdwg.mxu0
        %v1036 = vpack.c.bf16 %v905, %v902
        %v1038 = vunpack.c.l.b16 %v1036
        %v1039 = vunpack.c.h.b16 %v1036
        %v1040 = vpack.c.b16 %v1038, %v1038
        %v1041 = vpack.c.b16 %v1039, %v1039
        %v1042 = vpack.c.bf16 %v969, %v966
        %v1044 = vunpack.c.l.b16 %v1042
        %v1045 = vunpack.c.h.b16 %v1042
        %v1046 = vpack.c.b16 %v1044, %v1044
        %v1047 = vpack.c.b16 %v1045, %v1045
        %v1048 = vpack.c.bf16 %v1033, %v1030
        %v1050 = vunpack.c.l.b16 %v1048
        %v1051 = vunpack.c.h.b16 %v1048
        %v1052 = vpack.c.b16 %v1050, %v1050
        %v1053 = vpack.c.b16 %v1051, %v1051
        %v1054 = vld [vmem:[%s667] sm:$0xf]
        %v1055 = vld [vmem:[%s667 + $0x4] sm:$0xf]
        %v1056 = vld [vmem:[%s667 + $0x8] sm:$0xf]
        %v1057 = vld [vmem:[%s667 + $0xc] sm:$0xf]
        %vm1058 = vcmask 64512
        %v1060 = vsel %vm1058, %v1040, 0
        %v1063 = vsel %vm1058, %v1046, 0
        %1065 = vmatprep.subr.bf16.mxu0 0
        %1066 = vmatpush1.bf16.xpose.msra.mxu0 0
        %1067 = vmatprep.subr.bf16.mxu0 0
        %1068 = vmatpush1.bf16.xpose.msra.mxu0 0
        %1069 = vmatprep.subr.bf16.mxu0 0
        %1070 = vmatpush1.bf16.xpose.msra.mxu0 0
        %1071 = vmatprep.subr.bf16.mxu0 0
        %1072 = vmatpush1.bf16.xpose.msra.mxu0 0
        %1073 = vmatprep.subr.bf16.mxu0 0
        %1074 = vmatpush1.bf16.xpose.msra.mxu0 0
        %1075 = vmatprep.subr.bf16.mxu0 0
        %1076 = vmatpush1.bf16.xpose.msra.mxu0 0
        %1077 = vmatprep.subr.bf16.mxu0 0
        %1078 = vmatpush1.bf16.xpose.msra.mxu0 0
        %1079 = vmatprep.subr.bf16.mxu0 0
        %1080 = vmatpush1.bf16.xpose.msra.mxu0 %v1063
        %1081 = vmatprep.subr.bf16.mxu0 0
        %1082 = vmatpush2.bf16.xpose.msra.mxu0 0
        %1083 = vmatprep.subr.bf16.mxu0 0
        %1084 = vmatpush2.bf16.xpose.msra.mxu0 0
        %1085 = vmatprep.subr.bf16.mxu0 0
        %1086 = vmatpush2.bf16.xpose.msra.mxu0 0
        %1087 = vmatprep.subr.bf16.mxu0 0
        %1088 = vmatpush2.bf16.xpose.msra.mxu0 0
        %1089 = vmatprep.subr.bf16.mxu0 0
        %1090 = vmatpush2.bf16.xpose.msra.mxu0 0
        %1091 = vmatprep.subr.bf16.mxu0 0
        %1092 = vmatpush2.bf16.xpose.msra.mxu0 0
        %1093 = vmatprep.subr.bf16.mxu0 0
        %1094 = vmatpush2.bf16.xpose.msra.mxu0 0
        %1095 = vmatprep.subr.bf16.mxu0 0
        %1096 = vmatpush2.bf16.xpose.msra.mxu0 0
        %1097 = vmatprep.mubr.bf16.mxu0 0
        %1098 = vmatmul.mubr.bf16.gmra.mxu0 %v1060
        %v1099 = vpop.f32.mrf.mxu0
        %v1100 = vadd.f32 0.0, %v1099
        %v1101 = vpop.f32.mrf.mxu0
        %v1102 = vpop.f32.mrf.mxu0
        %v1103 = vpop.f32.mrf.mxu0
        %1104 = vdwg.mxu0
        %v1106 = vsel %vm1058, %v1041, 0
        %v1109 = vsel %vm1058, %v1047, 0
        %1111 = vmatprep.subr.bf16.mxu0 0
        %1112 = vmatpush1.bf16.xpose.msra.mxu0 0
        %1113 = vmatprep.subr.bf16.mxu0 0
        %1114 = vmatpush1.bf16.xpose.msra.mxu0 0
        %1115 = vmatprep.subr.bf16.mxu0 0
        %1116 = vmatpush1.bf16.xpose.msra.mxu0 0
        %1117 = vmatprep.subr.bf16.mxu0 0
        %1118 = vmatpush1.bf16.xpose.msra.mxu0 0
        %1119 = vmatprep.subr.bf16.mxu0 0
        %1120 = vmatpush1.bf16.xpose.msra.mxu0 0
        %1121 = vmatprep.subr.bf16.mxu0 0
        %1122 = vmatpush1.bf16.xpose.msra.mxu0 0
        %1123 = vmatprep.subr.bf16.mxu0 0
        %1124 = vmatpush1.bf16.xpose.msra.mxu0 0
        %1125 = vmatprep.subr.bf16.mxu0 0
        %1126 = vmatpush1.bf16.xpose.msra.mxu0 %v1109
        %1127 = vmatprep.subr.bf16.mxu0 0
        %1128 = vmatpush2.bf16.xpose.msra.mxu0 0
        %1129 = vmatprep.subr.bf16.mxu0 0
        %1130 = vmatpush2.bf16.xpose.msra.mxu0 0
        %1131 = vmatprep.subr.bf16.mxu0 0
        %1132 = vmatpush2.bf16.xpose.msra.mxu0 0
        %1133 = vmatprep.subr.bf16.mxu0 0
        %1134 = vmatpush2.bf16.xpose.msra.mxu0 0
        %1135 = vmatprep.subr.bf16.mxu0 0
        %1136 = vmatpush2.bf16.xpose.msra.mxu0 0
        %1137 = vmatprep.subr.bf16.mxu0 0
        %1138 = vmatpush2.bf16.xpose.msra.mxu0 0
        %1139 = vmatprep.subr.bf16.mxu0 0
        %1140 = vmatpush2.bf16.xpose.msra.mxu0 0
        %1141 = vmatprep.subr.bf16.mxu0 0
        %1142 = vmatpush2.bf16.xpose.msra.mxu0 0
        %1143 = vmatprep.mubr.bf16.mxu0 0
        %1144 = vmatmul.mubr.bf16.gmra.mxu0 %v1106
        %v1145 = vpop.f32.mrf.mxu0
        %v1146 = vadd.f32 0.0, %v1145
        %v1147 = vpop.f32.mrf.mxu0
        %v1148 = vpop.f32.mrf.mxu0
        %v1149 = vpop.f32.mrf.mxu0
        %1150 = vdwg.mxu0
        %v1151 = vsel %vm1058, %v1100, -inf
        %1152 = vmax.xlane.f32.xlu0 %v1151
        %v1153 = vpop.xlane.xlu0 %1152
        %v1154 = vsel %vm1058, %v1146, -inf
        %1155 = vmax.xlane.f32.xlu0 %v1154
        %v1156 = vpop.xlane.xlu0 %1155
        %v1157 = vsub.f32 %v1100, %v1153
        %v1158 = vsub.f32 %v1146, %v1156
        %v1159 = vmul.f32 %v1157, 1.442695
        %v1160 = vpow.pop %v1159
        %v1161 = vmul.f32 %v1158, 1.442695
        %v1162 = vpow.pop %v1161
        %v1163 = vsel %vm1058, %v1160, 0.0
        %1164 = vadd.xlane.f32.xlu0 %v1163
        %v1165 = vpop.xlane.xlu0 %1164
        %v1166 = vsel %vm1058, %v1162, 0.0
        %1167 = vadd.xlane.f32.xlu0 %v1166
        %v1168 = vpop.xlane.xlu0 %1167
        %v1169 = vrcp.pop %v1165
        %v1170 = vrcp.pop %v1168
        %v1171 = vmul.f32 %v1160, %v1169
        %v1172 = vmul.f32 %v1162, %v1170
        %v1173 = vpack.c.bf16 %v1171, %v1171
        %v1174 = vpack.c.bf16 %v1172, %v1172
        %v1176 = vsel %vm1058, %v1173, 0
        %vm1178 = vcmask 1043456
        %v1180 = vsel %vm1178, %v1052, 0
        %1182 = vmatprep.subr.bf16.mxu0 0
        %1183 = vmatpush1.bf16.msra.mxu0 0
        %1184 = vmatprep.subr.bf16.mxu0 0
        %1185 = vmatpush1.bf16.msra.mxu0 0
        %1186 = vmatprep.subr.bf16.mxu0 0
        %1187 = vmatpush1.bf16.msra.mxu0 0
        %1188 = vmatprep.subr.bf16.mxu0 0
        %1189 = vmatpush1.bf16.msra.mxu0 0
        %1190 = vmatprep.subr.bf16.mxu0 0
        %1191 = vmatpush1.bf16.msra.mxu0 0
        %1192 = vmatprep.subr.bf16.mxu0 0
        %1193 = vmatpush1.bf16.msra.mxu0 0
        %1194 = vmatprep.subr.bf16.mxu0 0
        %1195 = vmatpush1.bf16.msra.mxu0 0
        %1196 = vmatprep.subr.bf16.mxu0 0
        %1197 = vmatpush1.bf16.msra.mxu0 %v1180
        %1198 = vmatprep.subr.bf16.mxu0 0
        %1199 = vmatpush2.bf16.msra.mxu0 0
        %1200 = vmatprep.subr.bf16.mxu0 0
        %1201 = vmatpush2.bf16.msra.mxu0 0
        %1202 = vmatprep.subr.bf16.mxu0 0
        %1203 = vmatpush2.bf16.msra.mxu0 0
        %1204 = vmatprep.subr.bf16.mxu0 0
        %1205 = vmatpush2.bf16.msra.mxu0 0
        %1206 = vmatprep.subr.bf16.mxu0 0
        %1207 = vmatpush2.bf16.msra.mxu0 0
        %1208 = vmatprep.subr.bf16.mxu0 0
        %1209 = vmatpush2.bf16.msra.mxu0 0
        %1210 = vmatprep.subr.bf16.mxu0 0
        %1211 = vmatpush2.bf16.msra.mxu0 0
        %1212 = vmatprep.subr.bf16.mxu0 0
        %1213 = vmatpush2.bf16.msra.mxu0 0
        %1214 = vmatprep.mubr.bf16.mxu0 0
        %1215 = vmatmul.mubr.bf16.gmra.mxu0 %v1176
        %v1216 = vpop.f32.mrf.mxu0
        %v1217 = vadd.f32 0.0, %v1216
        %v1218 = vpop.f32.mrf.mxu0
        %v1219 = vpop.f32.mrf.mxu0
        %v1220 = vpop.f32.mrf.mxu0
        %1221 = vdwg.mxu0
        %v1223 = vsel %vm1058, %v1174, 0
        %v1226 = vsel %vm1178, %v1053, 0
        %1228 = vmatprep.subr.bf16.mxu0 0
        %1229 = vmatpush1.bf16.msra.mxu0 0
        %1230 = vmatprep.subr.bf16.mxu0 0
        %1231 = vmatpush1.bf16.msra.mxu0 0
        %1232 = vmatprep.subr.bf16.mxu0 0
        %1233 = vmatpush1.bf16.msra.mxu0 0
        %1234 = vmatprep.subr.bf16.mxu0 0
        %1235 = vmatpush1.bf16.msra.mxu0 0
        %1236 = vmatprep.subr.bf16.mxu0 0
        %1237 = vmatpush1.bf16.msra.mxu0 0
        %1238 = vmatprep.subr.bf16.mxu0 0
        %1239 = vmatpush1.bf16.msra.mxu0 0
        %1240 = vmatprep.subr.bf16.mxu0 0
        %1241 = vmatpush1.bf16.msra.mxu0 0
        %1242 = vmatprep.subr.bf16.mxu0 0
        %1243 = vmatpush1.bf16.msra.mxu0 %v1226
        %1244 = vmatprep.subr.bf16.mxu0 0
        %1245 = vmatpush2.bf16.msra.mxu0 0
        %1246 = vmatprep.subr.bf16.mxu0 0
        %1247 = vmatpush2.bf16.msra.mxu0 0
        %1248 = vmatprep.subr.bf16.mxu0 0
        %1249 = vmatpush2.bf16.msra.mxu0 0
        %1250 = vmatprep.subr.bf16.mxu0 0
        %1251 = vmatpush2.bf16.msra.mxu0 0
        %1252 = vmatprep.subr.bf16.mxu0 0
        %1253 = vmatpush2.bf16.msra.mxu0 0
        %1254 = vmatprep.subr.bf16.mxu0 0
        %1255 = vmatpush2.bf16.msra.mxu0 0
        %1256 = vmatprep.subr.bf16.mxu0 0
        %1257 = vmatpush2.bf16.msra.mxu0 0
        %1258 = vmatprep.subr.bf16.mxu0 0
        %1259 = vmatpush2.bf16.msra.mxu0 0
        %1260 = vmatprep.mubr.bf16.mxu0 0
        %1261 = vmatmul.mubr.bf16.gmra.mxu0 %v1223
        %v1262 = vpop.f32.mrf.mxu0
        %v1263 = vadd.f32 0.0, %v1262
        %v1264 = vpop.f32.mrf.mxu0
        %v1265 = vpop.f32.mrf.mxu0
        %v1266 = vpop.f32.mrf.mxu0
        %1267 = vdwg.mxu0
        %v1268 = vpack.c.bf16 %v1263, %v1217
        %1269 = vrot.lane.b32.xlu0 %v1040, 120
        %v1270 = vpop.permute.xlu0 %1269
        %1271 = vrot.lane.b32.xlu0 %v1046, 120
        %v1272 = vpop.permute.xlu0 %1271
        %v1274 = vsel %vm1058, %v1270, 0
        %v1277 = vsel %vm1058, %v1272, 0
        %1279 = vmatprep.subr.bf16.mxu0 0
        %1280 = vmatpush1.bf16.xpose.msra.mxu0 0
        %1281 = vmatprep.subr.bf16.mxu0 0
        %1282 = vmatpush1.bf16.xpose.msra.mxu0 0
        %1283 = vmatprep.subr.bf16.mxu0 0
        %1284 = vmatpush1.bf16.xpose.msra.mxu0 0
        %1285 = vmatprep.subr.bf16.mxu0 0
        %1286 = vmatpush1.bf16.xpose.msra.mxu0 0
        %1287 = vmatprep.subr.bf16.mxu0 0
        %1288 = vmatpush1.bf16.xpose.msra.mxu0 0
        %1289 = vmatprep.subr.bf16.mxu0 0
        %1290 = vmatpush1.bf16.xpose.msra.mxu0 0
        %1291 = vmatprep.subr.bf16.mxu0 0
        %1292 = vmatpush1.bf16.xpose.msra.mxu0 0
        %1293 = vmatprep.subr.bf16.mxu0 0
        %1294 = vmatpush1.bf16.xpose.msra.mxu0 %v1277
        %1295 = vmatprep.subr.bf16.mxu0 0
        %1296 = vmatpush2.bf16.xpose.msra.mxu0 0
        %1297 = vmatprep.subr.bf16.mxu0 0
        %1298 = vmatpush2.bf16.xpose.msra.mxu0 0
        %1299 = vmatprep.subr.bf16.mxu0 0
        %1300 = vmatpush2.bf16.xpose.msra.mxu0 0
        %1301 = vmatprep.subr.bf16.mxu0 0
        %1302 = vmatpush2.bf16.xpose.msra.mxu0 0
        %1303 = vmatprep.subr.bf16.mxu0 0
        %1304 = vmatpush2.bf16.xpose.msra.mxu0 0
        %1305 = vmatprep.subr.bf16.mxu0 0
        %1306 = vmatpush2.bf16.xpose.msra.mxu0 0
        %1307 = vmatprep.subr.bf16.mxu0 0
        %1308 = vmatpush2.bf16.xpose.msra.mxu0 0
        %1309 = vmatprep.subr.bf16.mxu0 0
        %1310 = vmatpush2.bf16.xpose.msra.mxu0 0
        %1311 = vmatprep.mubr.bf16.mxu0 0
        %1312 = vmatmul.mubr.bf16.gmra.mxu0 %v1274
        %v1313 = vpop.f32.mrf.mxu0
        %v1314 = vadd.f32 0.0, %v1313
        %v1315 = vpop.f32.mrf.mxu0
        %v1316 = vpop.f32.mrf.mxu0
        %v1317 = vpop.f32.mrf.mxu0
        %1318 = vdwg.mxu0
        %1319 = vrot.lane.b32.xlu0 %v1041, 120
        %v1320 = vpop.permute.xlu0 %1319
        %1321 = vrot.lane.b32.xlu0 %v1047, 120
        %v1322 = vpop.permute.xlu0 %1321
        %v1324 = vsel %vm1058, %v1320, 0
        %v1327 = vsel %vm1058, %v1322, 0
        %1329 = vmatprep.subr.bf16.mxu0 0
        %1330 = vmatpush1.bf16.xpose.msra.mxu0 0
        %1331 = vmatprep.subr.bf16.mxu0 0
        %1332 = vmatpush1.bf16.xpose.msra.mxu0 0
        %1333 = vmatprep.subr.bf16.mxu0 0
        %1334 = vmatpush1.bf16.xpose.msra.mxu0 0
        %1335 = vmatprep.subr.bf16.mxu0 0
        %1336 = vmatpush1.bf16.xpose.msra.mxu0 0
        %1337 = vmatprep.subr.bf16.mxu0 0
        %1338 = vmatpush1.bf16.xpose.msra.mxu0 0
        %1339 = vmatprep.subr.bf16.mxu0 0
        %1340 = vmatpush1.bf16.xpose.msra.mxu0 0
        %1341 = vmatprep.subr.bf16.mxu0 0
        %1342 = vmatpush1.bf16.xpose.msra.mxu0 0
        %1343 = vmatprep.subr.bf16.mxu0 0
        %1344 = vmatpush1.bf16.xpose.msra.mxu0 %v1327
        %1345 = vmatprep.subr.bf16.mxu0 0
        %1346 = vmatpush2.bf16.xpose.msra.mxu0 0
        %1347 = vmatprep.subr.bf16.mxu0 0
        %1348 = vmatpush2.bf16.xpose.msra.mxu0 0
        %1349 = vmatprep.subr.bf16.mxu0 0
        %1350 = vmatpush2.bf16.xpose.msra.mxu0 0
        %1351 = vmatprep.subr.bf16.mxu0 0
        %1352 = vmatpush2.bf16.xpose.msra.mxu0 0
        %1353 = vmatprep.subr.bf16.mxu0 0
        %1354 = vmatpush2.bf16.xpose.msra.mxu0 0
        %1355 = vmatprep.subr.bf16.mxu0 0
        %1356 = vmatpush2.bf16.xpose.msra.mxu0 0
        %1357 = vmatprep.subr.bf16.mxu0 0
        %1358 = vmatpush2.bf16.xpose.msra.mxu0 0
        %1359 = vmatprep.subr.bf16.mxu0 0
        %1360 = vmatpush2.bf16.xpose.msra.mxu0 0
        %1361 = vmatprep.mubr.bf16.mxu0 0
        %1362 = vmatmul.mubr.bf16.gmra.mxu0 %v1324
        %v1363 = vpop.f32.mrf.mxu0
        %v1364 = vadd.f32 0.0, %v1363
        %v1365 = vpop.f32.mrf.mxu0
        %v1366 = vpop.f32.mrf.mxu0
        %v1367 = vpop.f32.mrf.mxu0
        %1368 = vdwg.mxu0
        %v1369 = vsel %vm1058, %v1314, -inf
        %1370 = vmax.xlane.f32.xlu0 %v1369
        %v1371 = vpop.xlane.xlu0 %1370
        %v1372 = vsel %vm1058, %v1364, -inf
        %1373 = vmax.xlane.f32.xlu0 %v1372
        %v1374 = vpop.xlane.xlu0 %1373
        %v1375 = vsub.f32 %v1314, %v1371
        %v1376 = vsub.f32 %v1364, %v1374
        %v1377 = vmul.f32 %v1375, 1.442695
        %v1378 = vpow.pop %v1377
        %v1379 = vmul.f32 %v1376, 1.442695
        %v1380 = vpow.pop %v1379
        %v1381 = vsel %vm1058, %v1378, 0.0
        %1382 = vadd.xlane.f32.xlu0 %v1381
        %v1383 = vpop.xlane.xlu0 %1382
        %v1384 = vsel %vm1058, %v1380, 0.0
        %1385 = vadd.xlane.f32.xlu0 %v1384
        %v1386 = vpop.xlane.xlu0 %1385
        %v1387 = vrcp.pop %v1383
        %v1388 = vrcp.pop %v1386
        %v1389 = vmul.f32 %v1378, %v1387
        %v1390 = vmul.f32 %v1380, %v1388
        %v1391 = vpack.c.bf16 %v1389, %v1389
        %v1392 = vpack.c.bf16 %v1390, %v1390
        %1393 = vrot.lane.b32.xlu0 %v1052, 120
        %v1394 = vpop.permute.xlu0 %1393
        %v1396 = vsel %vm1058, %v1391, 0
        %v1399 = vsel %vm1178, %v1394, 0
        %1401 = vmatprep.subr.bf16.mxu0 0
        %1402 = vmatpush1.bf16.msra.mxu0 0
        %1403 = vmatprep.subr.bf16.mxu0 0
        %1404 = vmatpush1.bf16.msra.mxu0 0
        %1405 = vmatprep.subr.bf16.mxu0 0
        %1406 = vmatpush1.bf16.msra.mxu0 0
        %1407 = vmatprep.subr.bf16.mxu0 0
        %1408 = vmatpush1.bf16.msra.mxu0 0
        %1409 = vmatprep.subr.bf16.mxu0 0
        %1410 = vmatpush1.bf16.msra.mxu0 0
        %1411 = vmatprep.subr.bf16.mxu0 0
        %1412 = vmatpush1.bf16.msra.mxu0 0
        %1413 = vmatprep.subr.bf16.mxu0 0
        %1414 = vmatpush1.bf16.msra.mxu0 0
        %1415 = vmatprep.subr.bf16.mxu0 0
        %1416 = vmatpush1.bf16.msra.mxu0 %v1399
        %1417 = vmatprep.subr.bf16.mxu0 0
        %1418 = vmatpush2.bf16.msra.mxu0 0
        %1419 = vmatprep.subr.bf16.mxu0 0
        %1420 = vmatpush2.bf16.msra.mxu0 0
        %1421 = vmatprep.subr.bf16.mxu0 0
        %1422 = vmatpush2.bf16.msra.mxu0 0
        %1423 = vmatprep.subr.bf16.mxu0 0
        %1424 = vmatpush2.bf16.msra.mxu0 0
        %1425 = vmatprep.subr.bf16.mxu0 0
        %1426 = vmatpush2.bf16.msra.mxu0 0
        %1427 = vmatprep.subr.bf16.mxu0 0
        %1428 = vmatpush2.bf16.msra.mxu0 0
        %1429 = vmatprep.subr.bf16.mxu0 0
        %1430 = vmatpush2.bf16.msra.mxu0 0
        %1431 = vmatprep.subr.bf16.mxu0 0
        %1432 = vmatpush2.bf16.msra.mxu0 0
        %1433 = vmatprep.mubr.bf16.mxu0 0
        %1434 = vmatmul.mubr.bf16.gmra.mxu0 %v1396
        %v1435 = vpop.f32.mrf.mxu0
        %v1436 = vadd.f32 0.0, %v1435
        %v1437 = vpop.f32.mrf.mxu0
        %v1438 = vpop.f32.mrf.mxu0
        %v1439 = vpop.f32.mrf.mxu0
        %1440 = vdwg.mxu0
        %1441 = vrot.lane.b32.xlu0 %v1053, 120
        %v1442 = vpop.permute.xlu0 %1441
        %v1444 = vsel %vm1058, %v1392, 0
        %v1447 = vsel %vm1178, %v1442, 0
        %1449 = vmatprep.subr.bf16.mxu0 0
        %1450 = vmatpush1.bf16.msra.mxu0 0
        %1451 = vmatprep.subr.bf16.mxu0 0
        %1452 = vmatpush1.bf16.msra.mxu0 0
        %1453 = vmatprep.subr.bf16.mxu0 0
        %1454 = vmatpush1.bf16.msra.mxu0 0
        %1455 = vmatprep.subr.bf16.mxu0 0
        %1456 = vmatpush1.bf16.msra.mxu0 0
        %1457 = vmatprep.subr.bf16.mxu0 0
        %1458 = vmatpush1.bf16.msra.mxu0 0
        %1459 = vmatprep.subr.bf16.mxu0 0
        %1460 = vmatpush1.bf16.msra.mxu0 0
        %1461 = vmatprep.subr.bf16.mxu0 0
        %1462 = vmatpush1.bf16.msra.mxu0 0
        %1463 = vmatprep.subr.bf16.mxu0 0
        %1464 = vmatpush1.bf16.msra.mxu0 %v1447
        %1465 = vmatprep.subr.bf16.mxu0 0
        %1466 = vmatpush2.bf16.msra.mxu0 0
        %1467 = vmatprep.subr.bf16.mxu0 0
        %1468 = vmatpush2.bf16.msra.mxu0 0
        %1469 = vmatprep.subr.bf16.mxu0 0
        %1470 = vmatpush2.bf16.msra.mxu0 0
        %1471 = vmatprep.subr.bf16.mxu0 0
        %1472 = vmatpush2.bf16.msra.mxu0 0
        %1473 = vmatprep.subr.bf16.mxu0 0
        %1474 = vmatpush2.bf16.msra.mxu0 0
        %1475 = vmatprep.subr.bf16.mxu0 0
        %1476 = vmatpush2.bf16.msra.mxu0 0
        %1477 = vmatprep.subr.bf16.mxu0 0
        %1478 = vmatpush2.bf16.msra.mxu0 0
        %1479 = vmatprep.subr.bf16.mxu0 0
        %1480 = vmatpush2.bf16.msra.mxu0 0
        %1481 = vmatprep.mubr.bf16.mxu0 0
        %1482 = vmatmul.mubr.bf16.gmra.mxu0 %v1444
        %v1483 = vpop.f32.mrf.mxu0
        %v1484 = vadd.f32 0.0, %v1483
        %v1485 = vpop.f32.mrf.mxu0
        %v1486 = vpop.f32.mrf.mxu0
        %v1487 = vpop.f32.mrf.mxu0
        %1488 = vdwg.mxu0
        %v1489 = vpack.c.bf16 %v1484, %v1436
        %v1491 = vsel %vm1058, %v1489, 0
        %v1494 = vsel %vm1178, %v1055, 0
        %1496 = vmatprep.subr.bf16.mxu0 0
        %1497 = vmatpush1.bf16.msra.mxu0 0
        %1498 = vmatprep.subr.bf16.mxu0 0
        %1499 = vmatpush1.bf16.msra.mxu0 0
        %1500 = vmatprep.subr.bf16.mxu0 0
        %1501 = vmatpush1.bf16.msra.mxu0 0
        %1502 = vmatprep.subr.bf16.mxu0 0
        %1503 = vmatpush1.bf16.msra.mxu0 0
        %1504 = vmatprep.subr.bf16.mxu0 0
        %1505 = vmatpush1.bf16.msra.mxu0 0
        %1506 = vmatprep.subr.bf16.mxu0 0
        %1507 = vmatpush1.bf16.msra.mxu0 0
        %1508 = vmatprep.subr.bf16.mxu0 0
        %1509 = vmatpush1.bf16.msra.mxu0 0
        %1510 = vmatprep.subr.bf16.mxu0 0
        %1511 = vmatpush1.bf16.msra.mxu0 %v1494
        %1512 = vmatprep.subr.bf16.mxu0 0
        %1513 = vmatpush2.bf16.msra.mxu0 0
        %1514 = vmatprep.subr.bf16.mxu0 0
        %1515 = vmatpush2.bf16.msra.mxu0 0
        %1516 = vmatprep.subr.bf16.mxu0 0
        %1517 = vmatpush2.bf16.msra.mxu0 0
        %1518 = vmatprep.subr.bf16.mxu0 0
        %1519 = vmatpush2.bf16.msra.mxu0 0
        %1520 = vmatprep.subr.bf16.mxu0 0
        %1521 = vmatpush2.bf16.msra.mxu0 0
        %1522 = vmatprep.subr.bf16.mxu0 0
        %1523 = vmatpush2.bf16.msra.mxu0 0
        %1524 = vmatprep.subr.bf16.mxu0 0
        %1525 = vmatpush2.bf16.msra.mxu0 0
        %1526 = vmatprep.subr.bf16.mxu0 0
        %1527 = vmatpush2.bf16.msra.mxu0 0
        %1528 = vmatprep.mubr.bf16.mxu0 0
        %1529 = vmatmul.mubr.bf16.gmra.mxu0 %v1491
        %v1530 = vpop.f32.mrf.mxu0
        %v1531 = vadd.f32 0.0, %v1530
        %v1532 = vpop.f32.mrf.mxu0
        %v1533 = vpop.f32.mrf.mxu0
        %v1534 = vadd.f32 0.0, %v1533
        %v1535 = vpop.f32.mrf.mxu0
        %1536 = vdwg.mxu0
        %v1538 = vsel %vm1058, %v1268, 0
        %v1541 = vsel %vm1178, %v1054, 0
        %1543 = vmatprep.subr.bf16.mxu0 0
        %1544 = vmatpush1.bf16.msra.mxu0 0
        %1545 = vmatprep.subr.bf16.mxu0 0
        %1546 = vmatpush1.bf16.msra.mxu0 0
        %1547 = vmatprep.subr.bf16.mxu0 0
        %1548 = vmatpush1.bf16.msra.mxu0 0
        %1549 = vmatprep.subr.bf16.mxu0 0
        %1550 = vmatpush1.bf16.msra.mxu0 0
        %1551 = vmatprep.subr.bf16.mxu0 0
        %1552 = vmatpush1.bf16.msra.mxu0 0
        %1553 = vmatprep.subr.bf16.mxu0 0
        %1554 = vmatpush1.bf16.msra.mxu0 0
        %1555 = vmatprep.subr.bf16.mxu0 0
        %1556 = vmatpush1.bf16.msra.mxu0 0
        %1557 = vmatprep.subr.bf16.mxu0 0
        %1558 = vmatpush1.bf16.msra.mxu0 %v1541
        %1559 = vmatprep.subr.bf16.mxu0 0
        %1560 = vmatpush2.bf16.msra.mxu0 0
        %1561 = vmatprep.subr.bf16.mxu0 0
        %1562 = vmatpush2.bf16.msra.mxu0 0
        %1563 = vmatprep.subr.bf16.mxu0 0
        %1564 = vmatpush2.bf16.msra.mxu0 0
        %1565 = vmatprep.subr.bf16.mxu0 0
        %1566 = vmatpush2.bf16.msra.mxu0 0
        %1567 = vmatprep.subr.bf16.mxu0 0
        %1568 = vmatpush2.bf16.msra.mxu0 0
        %1569 = vmatprep.subr.bf16.mxu0 0
        %1570 = vmatpush2.bf16.msra.mxu0 0
        %1571 = vmatprep.subr.bf16.mxu0 0
        %1572 = vmatpush2.bf16.msra.mxu0 0
        %1573 = vmatprep.subr.bf16.mxu0 0
        %1574 = vmatpush2.bf16.msra.mxu0 0
        %1575 = vmatprep.mubr.bf16.mxu0 0
        %1576 = vmatmul.mubr.bf16.gmra.mxu0 %v1538
        %v1577 = vpop.f32.mrf.mxu0
        %v1578 = vadd.f32 %v1531, %v1577
        %v1579 = vpop.f32.mrf.mxu0
        %v1580 = vpop.f32.mrf.mxu0
        %v1581 = vadd.f32 %v1534, %v1580
        %v1582 = vpop.f32.mrf.mxu0
        %1583 = vdwg.mxu0
        %1584 = vrot.lane.b32.xlu0 %v1040, 112
        %v1585 = vpop.permute.xlu0 %1584
        %1586 = vrot.lane.b32.xlu0 %v1046, 112
        %v1587 = vpop.permute.xlu0 %1586
        %v1589 = vsel %vm1058, %v1585, 0
        %v1592 = vsel %vm1058, %v1587, 0
        %1594 = vmatprep.subr.bf16.mxu0 0
        %1595 = vmatpush1.bf16.xpose.msra.mxu0 0
        %1596 = vmatprep.subr.bf16.mxu0 0
        %1597 = vmatpush1.bf16.xpose.msra.mxu0 0
        %1598 = vmatprep.subr.bf16.mxu0 0
        %1599 = vmatpush1.bf16.xpose.msra.mxu0 0
        %1600 = vmatprep.subr.bf16.mxu0 0
        %1601 = vmatpush1.bf16.xpose.msra.mxu0 0
        %1602 = vmatprep.subr.bf16.mxu0 0
        %1603 = vmatpush1.bf16.xpose.msra.mxu0 0
        %1604 = vmatprep.subr.bf16.mxu0 0
        %1605 = vmatpush1.bf16.xpose.msra.mxu0 0
        %1606 = vmatprep.subr.bf16.mxu0 0
        %1607 = vmatpush1.bf16.xpose.msra.mxu0 0
        %1608 = vmatprep.subr.bf16.mxu0 0
        %1609 = vmatpush1.bf16.xpose.msra.mxu0 %v1592
        %1610 = vmatprep.subr.bf16.mxu0 0
        %1611 = vmatpush2.bf16.xpose.msra.mxu0 0
        %1612 = vmatprep.subr.bf16.mxu0 0
        %1613 = vmatpush2.bf16.xpose.msra.mxu0 0
        %1614 = vmatprep.subr.bf16.mxu0 0
        %1615 = vmatpush2.bf16.xpose.msra.mxu0 0
        %1616 = vmatprep.subr.bf16.mxu0 0
        %1617 = vmatpush2.bf16.xpose.msra.mxu0 0
        %1618 = vmatprep.subr.bf16.mxu0 0
        %1619 = vmatpush2.bf16.xpose.msra.mxu0 0
        %1620 = vmatprep.subr.bf16.mxu0 0
        %1621 = vmatpush2.bf16.xpose.msra.mxu0 0
        %1622 = vmatprep.subr.bf16.mxu0 0
        %1623 = vmatpush2.bf16.xpose.msra.mxu0 0
        %1624 = vmatprep.subr.bf16.mxu0 0
        %1625 = vmatpush2.bf16.xpose.msra.mxu0 0
        %1626 = vmatprep.mubr.bf16.mxu0 0
        %1627 = vmatmul.mubr.bf16.gmra.mxu0 %v1589
        %v1628 = vpop.f32.mrf.mxu0
        %v1629 = vadd.f32 0.0, %v1628
        %v1630 = vpop.f32.mrf.mxu0
        %v1631 = vpop.f32.mrf.mxu0
        %v1632 = vpop.f32.mrf.mxu0
        %1633 = vdwg.mxu0
        %1634 = vrot.lane.b32.xlu0 %v1041, 112
        %v1635 = vpop.permute.xlu0 %1634
        %1636 = vrot.lane.b32.xlu0 %v1047, 112
        %v1637 = vpop.permute.xlu0 %1636
        %v1639 = vsel %vm1058, %v1635, 0
        %v1642 = vsel %vm1058, %v1637, 0
        %1644 = vmatprep.subr.bf16.mxu0 0
        %1645 = vmatpush1.bf16.xpose.msra.mxu0 0
        %1646 = vmatprep.subr.bf16.mxu0 0
        %1647 = vmatpush1.bf16.xpose.msra.mxu0 0
        %1648 = vmatprep.subr.bf16.mxu0 0
        %1649 = vmatpush1.bf16.xpose.msra.mxu0 0
        %1650 = vmatprep.subr.bf16.mxu0 0
        %1651 = vmatpush1.bf16.xpose.msra.mxu0 0
        %1652 = vmatprep.subr.bf16.mxu0 0
        %1653 = vmatpush1.bf16.xpose.msra.mxu0 0
        %1654 = vmatprep.subr.bf16.mxu0 0
        %1655 = vmatpush1.bf16.xpose.msra.mxu0 0
        %1656 = vmatprep.subr.bf16.mxu0 0
        %1657 = vmatpush1.bf16.xpose.msra.mxu0 0
        %1658 = vmatprep.subr.bf16.mxu0 0
        %1659 = vmatpush1.bf16.xpose.msra.mxu0 %v1642
        %1660 = vmatprep.subr.bf16.mxu0 0
        %1661 = vmatpush2.bf16.xpose.msra.mxu0 0
        %1662 = vmatprep.subr.bf16.mxu0 0
        %1663 = vmatpush2.bf16.xpose.msra.mxu0 0
        %1664 = vmatprep.subr.bf16.mxu0 0
        %1665 = vmatpush2.bf16.xpose.msra.mxu0 0
        %1666 = vmatprep.subr.bf16.mxu0 0
        %1667 = vmatpush2.bf16.xpose.msra.mxu0 0
        %1668 = vmatprep.subr.bf16.mxu0 0
        %1669 = vmatpush2.bf16.xpose.msra.mxu0 0
        %1670 = vmatprep.subr.bf16.mxu0 0
        %1671 = vmatpush2.bf16.xpose.msra.mxu0 0
        %1672 = vmatprep.subr.bf16.mxu0 0
        %1673 = vmatpush2.bf16.xpose.msra.mxu0 0
        %1674 = vmatprep.subr.bf16.mxu0 0
        %1675 = vmatpush2.bf16.xpose.msra.mxu0 0
        %1676 = vmatprep.mubr.bf16.mxu0 0
        %1677 = vmatmul.mubr.bf16.gmra.mxu0 %v1639
        %v1678 = vpop.f32.mrf.mxu0
        %v1679 = vadd.f32 0.0, %v1678
        %v1680 = vpop.f32.mrf.mxu0
        %v1681 = vpop.f32.mrf.mxu0
        %v1682 = vpop.f32.mrf.mxu0
        %1683 = vdwg.mxu0
        %v1684 = vsel %vm1058, %v1629, -inf
        %1685 = vmax.xlane.f32.xlu0 %v1684
        %v1686 = vpop.xlane.xlu0 %1685
        %v1687 = vsel %vm1058, %v1679, -inf
        %1688 = vmax.xlane.f32.xlu0 %v1687
        %v1689 = vpop.xlane.xlu0 %1688
        %v1690 = vsub.f32 %v1629, %v1686
        %v1691 = vsub.f32 %v1679, %v1689
        %v1692 = vmul.f32 %v1690, 1.442695
        %v1693 = vpow.pop %v1692
        %v1694 = vmul.f32 %v1691, 1.442695
        %v1695 = vpow.pop %v1694
        %v1696 = vsel %vm1058, %v1693, 0.0
        %1697 = vadd.xlane.f32.xlu0 %v1696
        %v1698 = vpop.xlane.xlu0 %1697
        %v1699 = vsel %vm1058, %v1695, 0.0
        %1700 = vadd.xlane.f32.xlu0 %v1699
        %v1701 = vpop.xlane.xlu0 %1700
        %v1702 = vrcp.pop %v1698
        %v1703 = vrcp.pop %v1701
        %v1704 = vmul.f32 %v1693, %v1702
        %v1705 = vmul.f32 %v1695, %v1703
        %v1706 = vpack.c.bf16 %v1704, %v1704
        %v1707 = vpack.c.bf16 %v1705, %v1705
        %1708 = vrot.lane.b32.xlu0 %v1052, 112
        %v1709 = vpop.permute.xlu0 %1708
        %v1711 = vsel %vm1058, %v1706, 0
        %v1714 = vsel %vm1178, %v1709, 0
        %1716 = vmatprep.subr.bf16.mxu0 0
        %1717 = vmatpush1.bf16.msra.mxu0 0
        %1718 = vmatprep.subr.bf16.mxu0 0
        %1719 = vmatpush1.bf16.msra.mxu0 0
        %1720 = vmatprep.subr.bf16.mxu0 0
        %1721 = vmatpush1.bf16.msra.mxu0 0
        %1722 = vmatprep.subr.bf16.mxu0 0
        %1723 = vmatpush1.bf16.msra.mxu0 0
        %1724 = vmatprep.subr.bf16.mxu0 0
        %1725 = vmatpush1.bf16.msra.mxu0 0
        %1726 = vmatprep.subr.bf16.mxu0 0
        %1727 = vmatpush1.bf16.msra.mxu0 0
        %1728 = vmatprep.subr.bf16.mxu0 0
        %1729 = vmatpush1.bf16.msra.mxu0 0
        %1730 = vmatprep.subr.bf16.mxu0 0
        %1731 = vmatpush1.bf16.msra.mxu0 %v1714
        %1732 = vmatprep.subr.bf16.mxu0 0
        %1733 = vmatpush2.bf16.msra.mxu0 0
        %1734 = vmatprep.subr.bf16.mxu0 0
        %1735 = vmatpush2.bf16.msra.mxu0 0
        %1736 = vmatprep.subr.bf16.mxu0 0
        %1737 = vmatpush2.bf16.msra.mxu0 0
        %1738 = vmatprep.subr.bf16.mxu0 0
        %1739 = vmatpush2.bf16.msra.mxu0 0
        %1740 = vmatprep.subr.bf16.mxu0 0
        %1741 = vmatpush2.bf16.msra.mxu0 0
        %1742 = vmatprep.subr.bf16.mxu0 0
        %1743 = vmatpush2.bf16.msra.mxu0 0
        %1744 = vmatprep.subr.bf16.mxu0 0
        %1745 = vmatpush2.bf16.msra.mxu0 0
        %1746 = vmatprep.subr.bf16.mxu0 0
        %1747 = vmatpush2.bf16.msra.mxu0 0
        %1748 = vmatprep.mubr.bf16.mxu0 0
        %1749 = vmatmul.mubr.bf16.gmra.mxu0 %v1711
        %v1750 = vpop.f32.mrf.mxu0
        %v1751 = vadd.f32 0.0, %v1750
        %v1752 = vpop.f32.mrf.mxu0
        %v1753 = vpop.f32.mrf.mxu0
        %v1754 = vpop.f32.mrf.mxu0
        %1755 = vdwg.mxu0
        %1756 = vrot.lane.b32.xlu0 %v1053, 112
        %v1757 = vpop.permute.xlu0 %1756
        %v1759 = vsel %vm1058, %v1707, 0
        %v1762 = vsel %vm1178, %v1757, 0
        %1764 = vmatprep.subr.bf16.mxu0 0
        %1765 = vmatpush1.bf16.msra.mxu0 0
        %1766 = vmatprep.subr.bf16.mxu0 0
        %1767 = vmatpush1.bf16.msra.mxu0 0
        %1768 = vmatprep.subr.bf16.mxu0 0
        %1769 = vmatpush1.bf16.msra.mxu0 0
        %1770 = vmatprep.subr.bf16.mxu0 0
        %1771 = vmatpush1.bf16.msra.mxu0 0
        %1772 = vmatprep.subr.bf16.mxu0 0
        %1773 = vmatpush1.bf16.msra.mxu0 0
        %1774 = vmatprep.subr.bf16.mxu0 0
        %1775 = vmatpush1.bf16.msra.mxu0 0
        %1776 = vmatprep.subr.bf16.mxu0 0
        %1777 = vmatpush1.bf16.msra.mxu0 0
        %1778 = vmatprep.subr.bf16.mxu0 0
        %1779 = vmatpush1.bf16.msra.mxu0 %v1762
        %1780 = vmatprep.subr.bf16.mxu0 0
        %1781 = vmatpush2.bf16.msra.mxu0 0
        %1782 = vmatprep.subr.bf16.mxu0 0
        %1783 = vmatpush2.bf16.msra.mxu0 0
        %1784 = vmatprep.subr.bf16.mxu0 0
        %1785 = vmatpush2.bf16.msra.mxu0 0
        %1786 = vmatprep.subr.bf16.mxu0 0
        %1787 = vmatpush2.bf16.msra.mxu0 0
        %1788 = vmatprep.subr.bf16.mxu0 0
        %1789 = vmatpush2.bf16.msra.mxu0 0
        %1790 = vmatprep.subr.bf16.mxu0 0
        %1791 = vmatpush2.bf16.msra.mxu0 0
        %1792 = vmatprep.subr.bf16.mxu0 0
        %1793 = vmatpush2.bf16.msra.mxu0 0
        %1794 = vmatprep.subr.bf16.mxu0 0
        %1795 = vmatpush2.bf16.msra.mxu0 0
        %1796 = vmatprep.mubr.bf16.mxu0 0
        %1797 = vmatmul.mubr.bf16.gmra.mxu0 %v1759
        %v1798 = vpop.f32.mrf.mxu0
        %v1799 = vadd.f32 0.0, %v1798
        %v1800 = vpop.f32.mrf.mxu0
        %v1801 = vpop.f32.mrf.mxu0
        %v1802 = vpop.f32.mrf.mxu0
        %1803 = vdwg.mxu0
        %v1804 = vpack.c.bf16 %v1799, %v1751
        %v1806 = vsel %vm1058, %v1804, 0
        %v1809 = vsel %vm1178, %v1056, 0
        %1811 = vmatprep.subr.bf16.mxu0 0
        %1812 = vmatpush1.bf16.msra.mxu0 0
        %1813 = vmatprep.subr.bf16.mxu0 0
        %1814 = vmatpush1.bf16.msra.mxu0 0
        %1815 = vmatprep.subr.bf16.mxu0 0
        %1816 = vmatpush1.bf16.msra.mxu0 0
        %1817 = vmatprep.subr.bf16.mxu0 0
        %1818 = vmatpush1.bf16.msra.mxu0 0
        %1819 = vmatprep.subr.bf16.mxu0 0
        %1820 = vmatpush1.bf16.msra.mxu0 0
        %1821 = vmatprep.subr.bf16.mxu0 0
        %1822 = vmatpush1.bf16.msra.mxu0 0
        %1823 = vmatprep.subr.bf16.mxu0 0
        %1824 = vmatpush1.bf16.msra.mxu0 0
        %1825 = vmatprep.subr.bf16.mxu0 0
        %1826 = vmatpush1.bf16.msra.mxu0 %v1809
        %1827 = vmatprep.subr.bf16.mxu0 0
        %1828 = vmatpush2.bf16.msra.mxu0 0
        %1829 = vmatprep.subr.bf16.mxu0 0
        %1830 = vmatpush2.bf16.msra.mxu0 0
        %1831 = vmatprep.subr.bf16.mxu0 0
        %1832 = vmatpush2.bf16.msra.mxu0 0
        %1833 = vmatprep.subr.bf16.mxu0 0
        %1834 = vmatpush2.bf16.msra.mxu0 0
        %1835 = vmatprep.subr.bf16.mxu0 0
        %1836 = vmatpush2.bf16.msra.mxu0 0
        %1837 = vmatprep.subr.bf16.mxu0 0
        %1838 = vmatpush2.bf16.msra.mxu0 0
        %1839 = vmatprep.subr.bf16.mxu0 0
        %1840 = vmatpush2.bf16.msra.mxu0 0
        %1841 = vmatprep.subr.bf16.mxu0 0
        %1842 = vmatpush2.bf16.msra.mxu0 0
        %1843 = vmatprep.mubr.bf16.mxu0 0
        %1844 = vmatmul.mubr.bf16.gmra.mxu0 %v1806
        %v1845 = vpop.f32.mrf.mxu0
        %v1846 = vadd.f32 0.0, %v1845
        %v1847 = vpop.f32.mrf.mxu0
        %v1848 = vpop.f32.mrf.mxu0
        %v1849 = vadd.f32 0.0, %v1848
        %v1850 = vpop.f32.mrf.mxu0
        %1851 = vdwg.mxu0
        %v1852 = vadd.f32 %v1578, %v1846
        %v1853 = vadd.f32 %v1581, %v1849
        %1854 = vrot.lane.b32.xlu0 %v1040, 104
        %v1855 = vpop.permute.xlu0 %1854
        %1856 = vrot.lane.b32.xlu0 %v1046, 104
        %v1857 = vpop.permute.xlu0 %1856
        %v1859 = vsel %vm1058, %v1855, 0
        %v1862 = vsel %vm1058, %v1857, 0
        %1864 = vmatprep.subr.bf16.mxu0 0
        %1865 = vmatpush1.bf16.xpose.msra.mxu0 0
        %1866 = vmatprep.subr.bf16.mxu0 0
        %1867 = vmatpush1.bf16.xpose.msra.mxu0 0
        %1868 = vmatprep.subr.bf16.mxu0 0
        %1869 = vmatpush1.bf16.xpose.msra.mxu0 0
        %1870 = vmatprep.subr.bf16.mxu0 0
        %1871 = vmatpush1.bf16.xpose.msra.mxu0 0
        %1872 = vmatprep.subr.bf16.mxu0 0
        %1873 = vmatpush1.bf16.xpose.msra.mxu0 0
        %1874 = vmatprep.subr.bf16.mxu0 0
        %1875 = vmatpush1.bf16.xpose.msra.mxu0 0
        %1876 = vmatprep.subr.bf16.mxu0 0
        %1877 = vmatpush1.bf16.xpose.msra.mxu0 0
        %1878 = vmatprep.subr.bf16.mxu0 0
        %1879 = vmatpush1.bf16.xpose.msra.mxu0 %v1862
        %1880 = vmatprep.subr.bf16.mxu0 0
        %1881 = vmatpush2.bf16.xpose.msra.mxu0 0
        %1882 = vmatprep.subr.bf16.mxu0 0
        %1883 = vmatpush2.bf16.xpose.msra.mxu0 0
        %1884 = vmatprep.subr.bf16.mxu0 0
        %1885 = vmatpush2.bf16.xpose.msra.mxu0 0
        %1886 = vmatprep.subr.bf16.mxu0 0
        %1887 = vmatpush2.bf16.xpose.msra.mxu0 0
        %1888 = vmatprep.subr.bf16.mxu0 0
        %1889 = vmatpush2.bf16.xpose.msra.mxu0 0
        %1890 = vmatprep.subr.bf16.mxu0 0
        %1891 = vmatpush2.bf16.xpose.msra.mxu0 0
        %1892 = vmatprep.subr.bf16.mxu0 0
        %1893 = vmatpush2.bf16.xpose.msra.mxu0 0
        %1894 = vmatprep.subr.bf16.mxu0 0
        %1895 = vmatpush2.bf16.xpose.msra.mxu0 0
        %1896 = vmatprep.mubr.bf16.mxu0 0
        %1897 = vmatmul.mubr.bf16.gmra.mxu0 %v1859
        %v1898 = vpop.f32.mrf.mxu0
        %v1899 = vadd.f32 0.0, %v1898
        %v1900 = vpop.f32.mrf.mxu0
        %v1901 = vpop.f32.mrf.mxu0
        %v1902 = vpop.f32.mrf.mxu0
        %1903 = vdwg.mxu0
        %1904 = vrot.lane.b32.xlu0 %v1041, 104
        %v1905 = vpop.permute.xlu0 %1904
        %1906 = vrot.lane.b32.xlu0 %v1047, 104
        %v1907 = vpop.permute.xlu0 %1906
        %v1909 = vsel %vm1058, %v1905, 0
        %v1912 = vsel %vm1058, %v1907, 0
        %1914 = vmatprep.subr.bf16.mxu0 0
        %1915 = vmatpush1.bf16.xpose.msra.mxu0 0
        %1916 = vmatprep.subr.bf16.mxu0 0
        %1917 = vmatpush1.bf16.xpose.msra.mxu0 0
        %1918 = vmatprep.subr.bf16.mxu0 0
        %1919 = vmatpush1.bf16.xpose.msra.mxu0 0
        %1920 = vmatprep.subr.bf16.mxu0 0
        %1921 = vmatpush1.bf16.xpose.msra.mxu0 0
        %1922 = vmatprep.subr.bf16.mxu0 0
        %1923 = vmatpush1.bf16.xpose.msra.mxu0 0
        %1924 = vmatprep.subr.bf16.mxu0 0
        %1925 = vmatpush1.bf16.xpose.msra.mxu0 0
        %1926 = vmatprep.subr.bf16.mxu0 0
        %1927 = vmatpush1.bf16.xpose.msra.mxu0 0
        %1928 = vmatprep.subr.bf16.mxu0 0
        %1929 = vmatpush1.bf16.xpose.msra.mxu0 %v1912
        %1930 = vmatprep.subr.bf16.mxu0 0
        %1931 = vmatpush2.bf16.xpose.msra.mxu0 0
        %1932 = vmatprep.subr.bf16.mxu0 0
        %1933 = vmatpush2.bf16.xpose.msra.mxu0 0
        %1934 = vmatprep.subr.bf16.mxu0 0
        %1935 = vmatpush2.bf16.xpose.msra.mxu0 0
        %1936 = vmatprep.subr.bf16.mxu0 0
        %1937 = vmatpush2.bf16.xpose.msra.mxu0 0
        %1938 = vmatprep.subr.bf16.mxu0 0
        %1939 = vmatpush2.bf16.xpose.msra.mxu0 0
        %1940 = vmatprep.subr.bf16.mxu0 0
        %1941 = vmatpush2.bf16.xpose.msra.mxu0 0
        %1942 = vmatprep.subr.bf16.mxu0 0
        %1943 = vmatpush2.bf16.xpose.msra.mxu0 0
        %1944 = vmatprep.subr.bf16.mxu0 0
        %1945 = vmatpush2.bf16.xpose.msra.mxu0 0
        %1946 = vmatprep.mubr.bf16.mxu0 0
        %1947 = vmatmul.mubr.bf16.gmra.mxu0 %v1909
        %v1948 = vpop.f32.mrf.mxu0
        %v1949 = vadd.f32 0.0, %v1948
        %v1950 = vpop.f32.mrf.mxu0
        %v1951 = vpop.f32.mrf.mxu0
        %v1952 = vpop.f32.mrf.mxu0
        %1953 = vdwg.mxu0
        %v1954 = vsel %vm1058, %v1899, -inf
        %1955 = vmax.xlane.f32.xlu0 %v1954
        %v1956 = vpop.xlane.xlu0 %1955
        %v1957 = vsel %vm1058, %v1949, -inf
        %1958 = vmax.xlane.f32.xlu0 %v1957
        %v1959 = vpop.xlane.xlu0 %1958
        %v1960 = vsub.f32 %v1899, %v1956
        %v1961 = vsub.f32 %v1949, %v1959
        %v1962 = vmul.f32 %v1960, 1.442695
        %v1963 = vpow.pop %v1962
        %v1964 = vmul.f32 %v1961, 1.442695
        %v1965 = vpow.pop %v1964
        %v1966 = vsel %vm1058, %v1963, 0.0
        %1967 = vadd.xlane.f32.xlu0 %v1966
        %v1968 = vpop.xlane.xlu0 %1967
        %v1969 = vsel %vm1058, %v1965, 0.0
        %1970 = vadd.xlane.f32.xlu0 %v1969
        %v1971 = vpop.xlane.xlu0 %1970
        %v1972 = vrcp.pop %v1968
        %v1973 = vrcp.pop %v1971
        %v1974 = vmul.f32 %v1963, %v1972
        %v1975 = vmul.f32 %v1965, %v1973
        %v1976 = vpack.c.bf16 %v1974, %v1974
        %v1977 = vpack.c.bf16 %v1975, %v1975
        %1978 = vrot.lane.b32.xlu0 %v1052, 104
        %v1979 = vpop.permute.xlu0 %1978
        %v1981 = vsel %vm1058, %v1976, 0
        %v1984 = vsel %vm1178, %v1979, 0
        %1986 = vmatprep.subr.bf16.mxu0 0
        %1987 = vmatpush1.bf16.msra.mxu0 0
        %1988 = vmatprep.subr.bf16.mxu0 0
        %1989 = vmatpush1.bf16.msra.mxu0 0
        %1990 = vmatprep.subr.bf16.mxu0 0
        %1991 = vmatpush1.bf16.msra.mxu0 0
        %1992 = vmatprep.subr.bf16.mxu0 0
        %1993 = vmatpush1.bf16.msra.mxu0 0
        %1994 = vmatprep.subr.bf16.mxu0 0
        %1995 = vmatpush1.bf16.msra.mxu0 0
        %1996 = vmatprep.subr.bf16.mxu0 0
        %1997 = vmatpush1.bf16.msra.mxu0 0
        %1998 = vmatprep.subr.bf16.mxu0 0
        %1999 = vmatpush1.bf16.msra.mxu0 0
        %2000 = vmatprep.subr.bf16.mxu0 0
        %2001 = vmatpush1.bf16.msra.mxu0 %v1984
        %2002 = vmatprep.subr.bf16.mxu0 0
        %2003 = vmatpush2.bf16.msra.mxu0 0
        %2004 = vmatprep.subr.bf16.mxu0 0
        %2005 = vmatpush2.bf16.msra.mxu0 0
        %2006 = vmatprep.subr.bf16.mxu0 0
        %2007 = vmatpush2.bf16.msra.mxu0 0
        %2008 = vmatprep.subr.bf16.mxu0 0
        %2009 = vmatpush2.bf16.msra.mxu0 0
        %2010 = vmatprep.subr.bf16.mxu0 0
        %2011 = vmatpush2.bf16.msra.mxu0 0
        %2012 = vmatprep.subr.bf16.mxu0 0
        %2013 = vmatpush2.bf16.msra.mxu0 0
        %2014 = vmatprep.subr.bf16.mxu0 0
        %2015 = vmatpush2.bf16.msra.mxu0 0
        %2016 = vmatprep.subr.bf16.mxu0 0
        %2017 = vmatpush2.bf16.msra.mxu0 0
        %2018 = vmatprep.mubr.bf16.mxu0 0
        %2019 = vmatmul.mubr.bf16.gmra.mxu0 %v1981
        %v2020 = vpop.f32.mrf.mxu0
        %v2021 = vadd.f32 0.0, %v2020
        %v2022 = vpop.f32.mrf.mxu0
        %v2023 = vpop.f32.mrf.mxu0
        %v2024 = vpop.f32.mrf.mxu0
        %2025 = vdwg.mxu0
        %2026 = vrot.lane.b32.xlu0 %v1053, 104
        %v2027 = vpop.permute.xlu0 %2026
        %v2029 = vsel %vm1058, %v1977, 0
        %v2032 = vsel %vm1178, %v2027, 0
        %2034 = vmatprep.subr.bf16.mxu0 0
        %2035 = vmatpush1.bf16.msra.mxu0 0
        %2036 = vmatprep.subr.bf16.mxu0 0
        %2037 = vmatpush1.bf16.msra.mxu0 0
        %2038 = vmatprep.subr.bf16.mxu0 0
        %2039 = vmatpush1.bf16.msra.mxu0 0
        %2040 = vmatprep.subr.bf16.mxu0 0
        %2041 = vmatpush1.bf16.msra.mxu0 0
        %2042 = vmatprep.subr.bf16.mxu0 0
        %2043 = vmatpush1.bf16.msra.mxu0 0
        %2044 = vmatprep.subr.bf16.mxu0 0
        %2045 = vmatpush1.bf16.msra.mxu0 0
        %2046 = vmatprep.subr.bf16.mxu0 0
        %2047 = vmatpush1.bf16.msra.mxu0 0
        %2048 = vmatprep.subr.bf16.mxu0 0
        %2049 = vmatpush1.bf16.msra.mxu0 %v2032
        %2050 = vmatprep.subr.bf16.mxu0 0
        %2051 = vmatpush2.bf16.msra.mxu0 0
        %2052 = vmatprep.subr.bf16.mxu0 0
        %2053 = vmatpush2.bf16.msra.mxu0 0
        %2054 = vmatprep.subr.bf16.mxu0 0
        %2055 = vmatpush2.bf16.msra.mxu0 0
        %2056 = vmatprep.subr.bf16.mxu0 0
        %2057 = vmatpush2.bf16.msra.mxu0 0
        %2058 = vmatprep.subr.bf16.mxu0 0
        %2059 = vmatpush2.bf16.msra.mxu0 0
        %2060 = vmatprep.subr.bf16.mxu0 0
        %2061 = vmatpush2.bf16.msra.mxu0 0
        %2062 = vmatprep.subr.bf16.mxu0 0
        %2063 = vmatpush2.bf16.msra.mxu0 0
        %2064 = vmatprep.subr.bf16.mxu0 0
        %2065 = vmatpush2.bf16.msra.mxu0 0
        %2066 = vmatprep.mubr.bf16.mxu0 0
        %2067 = vmatmul.mubr.bf16.gmra.mxu0 %v2029
        %v2068 = vpop.f32.mrf.mxu0
        %v2069 = vadd.f32 0.0, %v2068
        %v2070 = vpop.f32.mrf.mxu0
        %v2071 = vpop.f32.mrf.mxu0
        %v2072 = vpop.f32.mrf.mxu0
        %2073 = vdwg.mxu0
        %v2074 = vpack.c.bf16 %v2069, %v2021
        %v2076 = vsel %vm1058, %v2074, 0
        %v2079 = vsel %vm1178, %v1057, 0
        %2081 = vmatprep.subr.bf16.mxu0 0
        %2082 = vmatpush1.bf16.msra.mxu0 0
        %2083 = vmatprep.subr.bf16.mxu0 0
        %2084 = vmatpush1.bf16.msra.mxu0 0
        %2085 = vmatprep.subr.bf16.mxu0 0
        %2086 = vmatpush1.bf16.msra.mxu0 0
        %2087 = vmatprep.subr.bf16.mxu0 0
        %2088 = vmatpush1.bf16.msra.mxu0 0
        %2089 = vmatprep.subr.bf16.mxu0 0
        %2090 = vmatpush1.bf16.msra.mxu0 0
        %2091 = vmatprep.subr.bf16.mxu0 0
        %2092 = vmatpush1.bf16.msra.mxu0 0
        %2093 = vmatprep.subr.bf16.mxu0 0
        %2094 = vmatpush1.bf16.msra.mxu0 0
        %2095 = vmatprep.subr.bf16.mxu0 0
        %2096 = vmatpush1.bf16.msra.mxu0 %v2079
        %2097 = vmatprep.subr.bf16.mxu0 0
        %2098 = vmatpush2.bf16.msra.mxu0 0
        %2099 = vmatprep.subr.bf16.mxu0 0
        %2100 = vmatpush2.bf16.msra.mxu0 0
        %2101 = vmatprep.subr.bf16.mxu0 0
        %2102 = vmatpush2.bf16.msra.mxu0 0
        %2103 = vmatprep.subr.bf16.mxu0 0
        %2104 = vmatpush2.bf16.msra.mxu0 0
        %2105 = vmatprep.subr.bf16.mxu0 0
        %2106 = vmatpush2.bf16.msra.mxu0 0
        %2107 = vmatprep.subr.bf16.mxu0 0
        %2108 = vmatpush2.bf16.msra.mxu0 0
        %2109 = vmatprep.subr.bf16.mxu0 0
        %2110 = vmatpush2.bf16.msra.mxu0 0
        %2111 = vmatprep.subr.bf16.mxu0 0
        %2112 = vmatpush2.bf16.msra.mxu0 0
        %2113 = vmatprep.mubr.bf16.mxu0 0
        %2114 = vmatmul.mubr.bf16.gmra.mxu0 %v2076
        %v2115 = vpop.f32.mrf.mxu0
        %v2116 = vadd.f32 0.0, %v2115
        %v2117 = vpop.f32.mrf.mxu0
        %v2118 = vpop.f32.mrf.mxu0
        %v2119 = vadd.f32 0.0, %v2118
        %v2120 = vpop.f32.mrf.mxu0
        %2121 = vdwg.mxu0
        %v2122 = vadd.f32 %v1852, %v2116
        %v2123 = vadd.f32 %v1853, %v2119
        %v2124 = vld [vmem:[%s803] sm:$0x1]
        %v2126 = vlaneseq
        %v2127 = vshrl.u32 %v2126, 7
        %v2128 = vsub.s32 0, %v2127
        %v2129 = vrot.slane %v2124, %v2128
        %v2131 = vadd.f32 %v2122, %v2129
        %v2132 = vadd.f32 %v2123, %v2129
        %v2133 = vadd.f32 %v837, %v2131
        %v2134 = vadd.f32 %v838, %v2132
        %v2135 = vld [vmem:[%s806] sm:$0x1]
        %v2136 = vld [vmem:[%s809] sm:$0x1]
        %v2137 = vsel %vm863, %v2133, 0.0
        %2138 = vadd.xlane.f32.xlu0 %v2137
        %v2139 = vpop.xlane.xlu0 %2138
        %v2140 = vsel %vm863, %v2134, 0.0
        %2141 = vadd.xlane.f32.xlu0 %v2140
        %v2142 = vpop.xlane.xlu0 %2141
        %v2143 = vrcp.pop 32.0
        %v2144 = vmul.f32 %v2139, %v2143
        %v2145 = vmul.f32 %v2142, %v2143
        %v2146 = vsub.f32 %v2133, %v2144
        %v2147 = vsub.f32 %v2134, %v2145
        %v2148 = vmul.f32 %v2146, %v2146
        %v2149 = vmul.f32 %v2147, %v2147
        %v2150 = vsel %vm863, %v2148, 0.0
        %2151 = vadd.xlane.f32.xlu0 %v2150
        %v2152 = vpop.xlane.xlu0 %2151
        %v2153 = vsel %vm863, %v2149, 0.0
        %2154 = vadd.xlane.f32.xlu0 %v2153
        %v2155 = vpop.xlane.xlu0 %2154
        %v2156 = vmul.f32 %v2152, %v2143
        %v2157 = vmul.f32 %v2155, %v2143
        %v2158 = vadd.f32 %v2156, 1e-05
        %v2159 = vadd.f32 %v2157, 1e-05
        %v2160 = vrsqrt.pop %v2158
        %v2161 = vrsqrt.pop %v2159
        %v2162 = vmul.f32 %v2146, %v2160
        %v2163 = vmul.f32 %v2147, %v2161
        %v2165 = vlaneseq
        %v2166 = vshrl.u32 %v2165, 7
        %v2167 = vsub.s32 0, %v2166
        %v2168 = vrot.slane %v2135, %v2167
        %v2170 = vmul.f32 %v2162, %v2168
        %v2171 = vmul.f32 %v2163, %v2168
        %v2173 = vlaneseq
        %v2174 = vshrl.u32 %v2173, 7
        %v2175 = vsub.s32 0, %v2174
        %v2176 = vrot.slane %v2136, %v2175
        %v2178 = vadd.f32 %v2170, %v2176
        %v2179 = vadd.f32 %v2171, %v2176
        %v2180 = vpack.c.bf16 %v2179, %v2178
        %v2181 = vld [vmem:[%s676] sm:$0xf]
        %v2182 = vld [vmem:[%s676 + $0x4] sm:$0xf]
        %v2183 = vld [vmem:[%s676 + $0x8] sm:$0xf]
        %v2184 = vld [vmem:[%s676 + $0xc] sm:$0xf]
        %v2185 = vld [vmem:[%s812] sm:$0x1]
        %v2187 = vlaneseq
        %v2188 = vshrl.u32 %v2187, 7
        %v2189 = vsub.s32 0, %v2188
        %v2190 = vrot.slane %v2185, %v2189
        %v2196 = vunpack.c.l.b16 %v2181
        %v2197 = vunpack.c.l.b16 %v2182
        %v2198 = vunpack.c.l.b16 %v2183
        %v2199 = vunpack.c.l.b16 %v2184
        %v2200 = vpack.c.b16 %v2197, %v2196
        %v2201 = vpack.c.b16 %v2199, %v2198
        %v2205 = vsel %vm863, %v2180, 0
        %2207 = vmatprep.subr.bf16.mxu0 0
        %2208 = vmatpush1.bf16.msra.mxu0 0
        %2209 = vmatprep.subr.bf16.mxu0 0
        %2210 = vmatpush1.bf16.msra.mxu0 0
        %2211 = vmatprep.subr.bf16.mxu0 0
        %2212 = vmatpush1.bf16.msra.mxu0 0
        %2213 = vmatprep.subr.bf16.mxu0 0
        %2214 = vmatpush1.bf16.msra.mxu0 0
        %2215 = vmatprep.subr.bf16.mxu0 0
        %2216 = vmatpush1.bf16.msra.mxu0 0
        %2217 = vmatprep.subr.bf16.mxu0 0
        %2218 = vmatpush1.bf16.msra.mxu0 0
        %2219 = vmatprep.subr.bf16.mxu0 0
        %2220 = vmatpush1.bf16.msra.mxu0 %v2201
        %2221 = vmatprep.subr.bf16.mxu0 0
        %2222 = vmatpush1.bf16.msra.mxu0 %v2200
        %2223 = vmatprep.subr.bf16.mxu0 0
        %2224 = vmatpush2.bf16.msra.mxu0 0
        %2225 = vmatprep.subr.bf16.mxu0 0
        %2226 = vmatpush2.bf16.msra.mxu0 0
        %2227 = vmatprep.subr.bf16.mxu0 0
        %2228 = vmatpush2.bf16.msra.mxu0 0
        %2229 = vmatprep.subr.bf16.mxu0 0
        %2230 = vmatpush2.bf16.msra.mxu0 0
        %2231 = vmatprep.subr.bf16.mxu0 0
        %2232 = vmatpush2.bf16.msra.mxu0 0
        %2233 = vmatprep.subr.bf16.mxu0 0
        %2234 = vmatpush2.bf16.msra.mxu0 0
        %2235 = vmatprep.subr.bf16.mxu0 0
        %2236 = vmatpush2.bf16.msra.mxu0 0
        %2237 = vmatprep.subr.bf16.mxu0 0
        %2238 = vmatpush2.bf16.msra.mxu0 0
        %2239 = vmatprep.mubr.bf16.mxu0 0
        %2240 = vmatmul.mubr.bf16.gmra.mxu0 %v2205
        %v2241 = vpop.f32.mrf.mxu0
        %v2242 = vadd.f32 %v2190, %v2241
        %v2243 = vpop.f32.mrf.mxu0
        %v2244 = vpop.f32.mrf.mxu0
        %v2245 = vadd.f32 %v2190, %v2244
        %v2246 = vpop.f32.mrf.mxu0
        %2247 = vdwg.mxu0
        %v2248 = vmax.f32 %v2242, 0.0
        %v2249 = vmax.f32 %v2245, 0.0
        %v2250 = vpack.c.bf16 %v2249, %v2248
        %v2251 = vld [vmem:[%s817] sm:$0xf]
        %v2252 = vld [vmem:[%s817 + $0x4] sm:$0xf]
        %v2253 = vld [vmem:[%s817 + $0x8] sm:$0xf]
        %v2254 = vld [vmem:[%s817 + $0xc] sm:$0xf]
        %v2255 = vld [vmem:[%s817 + $0x10] sm:$0xf]
        %v2256 = vld [vmem:[%s817 + $0x14] sm:$0xf]
        %v2257 = vld [vmem:[%s817 + $0x18] sm:$0xf]
        %v2258 = vld [vmem:[%s817 + $0x1c] sm:$0xf]
        %v2259 = vld [vmem:[%s820] sm:$0x1]
        %v2261 = vlaneseq
        %v2262 = vshrl.u32 %v2261, 7
        %v2263 = vsub.s32 0, %v2262
        %v2264 = vrot.slane %v2259, %v2263
        %v2274 = vunpack.c.l.b16 %v2251
        %v2275 = vunpack.c.l.b16 %v2252
        %v2276 = vunpack.c.l.b16 %v2253
        %v2277 = vunpack.c.l.b16 %v2254
        %v2278 = vunpack.c.l.b16 %v2255
        %v2279 = vunpack.c.l.b16 %v2256
        %v2280 = vunpack.c.l.b16 %v2257
        %v2281 = vunpack.c.l.b16 %v2258
        %v2282 = vpack.c.b16 %v2275, %v2274
        %v2283 = vpack.c.b16 %v2277, %v2276
        %v2284 = vpack.c.b16 %v2279, %v2278
        %v2285 = vpack.c.b16 %v2281, %v2280
        %vm2290 = vcmask 523264
        %v2292 = vsel %vm2290, %v2250, 0
        %2294 = vmatprep.subr.bf16.mxu0 0
        %2295 = vmatpush1.bf16.msra.mxu0 0
        %2296 = vmatprep.subr.bf16.mxu0 0
        %2297 = vmatpush1.bf16.msra.mxu0 0
        %2298 = vmatprep.subr.bf16.mxu0 0
        %2299 = vmatpush1.bf16.msra.mxu0 0
        %2300 = vmatprep.subr.bf16.mxu0 0
        %2301 = vmatpush1.bf16.msra.mxu0 0
        %2302 = vmatprep.subr.bf16.mxu0 0
        %2303 = vmatpush1.bf16.msra.mxu0 %v2285
        %2304 = vmatprep.subr.bf16.mxu0 0
        %2305 = vmatpush1.bf16.msra.mxu0 %v2284
        %2306 = vmatprep.subr.bf16.mxu0 0
        %2307 = vmatpush1.bf16.msra.mxu0 %v2283
        %2308 = vmatprep.subr.bf16.mxu0 0
        %2309 = vmatpush1.bf16.msra.mxu0 %v2282
        %2310 = vmatprep.subr.bf16.mxu0 0
        %2311 = vmatpush2.bf16.msra.mxu0 0
        %2312 = vmatprep.subr.bf16.mxu0 0
        %2313 = vmatpush2.bf16.msra.mxu0 0
        %2314 = vmatprep.subr.bf16.mxu0 0
        %2315 = vmatpush2.bf16.msra.mxu0 0
        %2316 = vmatprep.subr.bf16.mxu0 0
        %2317 = vmatpush2.bf16.msra.mxu0 0
        %2318 = vmatprep.subr.bf16.mxu0 0
        %2319 = vmatpush2.bf16.msra.mxu0 0
        %2320 = vmatprep.subr.bf16.mxu0 0
        %2321 = vmatpush2.bf16.msra.mxu0 0
        %2322 = vmatprep.subr.bf16.mxu0 0
        %2323 = vmatpush2.bf16.msra.mxu0 0
        %2324 = vmatprep.subr.bf16.mxu0 0
        %2325 = vmatpush2.bf16.msra.mxu0 0
        %2326 = vmatprep.mubr.bf16.mxu0 0
        %2327 = vmatmul.mubr.bf16.gmra.mxu0 %v2292
        %v2328 = vpop.f32.mrf.mxu0
        %v2329 = vadd.f32 %v2264, %v2328
        %v2330 = vpop.f32.mrf.mxu0
        %v2331 = vpop.f32.mrf.mxu0
        %v2332 = vadd.f32 %v2264, %v2331
        %v2333 = vpop.f32.mrf.mxu0
        %2334 = vdwg.mxu0
        %v2335 = vadd.f32 %v2178, %v2329
        %v2336 = vadd.f32 %v2179, %v2332
        %v2337 = vld [vmem:[%s823] sm:$0x1]
        %v2338 = vld [vmem:[%s826] sm:$0x1]
        %v2339 = vsel %vm863, %v2335, 0.0
        %2340 = vadd.xlane.f32.xlu0 %v2339
        %v2341 = vpop.xlane.xlu0 %2340
        %v2342 = vsel %vm863, %v2336, 0.0
        %2343 = vadd.xlane.f32.xlu0 %v2342
        %v2344 = vpop.xlane.xlu0 %2343
        %v2345 = vmul.f32 %v2341, %v2143
        %v2346 = vmul.f32 %v2344, %v2143
        %v2347 = vsub.f32 %v2335, %v2345
        %v2348 = vsub.f32 %v2336, %v2346
        %v2349 = vmul.f32 %v2347, %v2347
        %v2350 = vmul.f32 %v2348, %v2348
        %v2351 = vsel %vm863, %v2349, 0.0
        %2352 = vadd.xlane.f32.xlu0 %v2351
        %v2353 = vpop.xlane.xlu0 %2352
        %v2354 = vsel %vm863, %v2350, 0.0
        %2355 = vadd.xlane.f32.xlu0 %v2354
        %v2356 = vpop.xlane.xlu0 %2355
        %v2357 = vmul.f32 %v2353, %v2143
        %v2358 = vmul.f32 %v2356, %v2143
        %v2359 = vadd.f32 %v2357, 1e-05
        %v2360 = vadd.f32 %v2358, 1e-05
        %v2361 = vrsqrt.pop %v2359
        %v2362 = vrsqrt.pop %v2360
        %v2363 = vmul.f32 %v2347, %v2361
        %v2364 = vmul.f32 %v2348, %v2362
        %v2366 = vlaneseq
        %v2367 = vshrl.u32 %v2366, 7
        %v2368 = vsub.s32 0, %v2367
        %v2369 = vrot.slane %v2337, %v2368
        %v2371 = vmul.f32 %v2363, %v2369
        %v2372 = vmul.f32 %v2364, %v2369
        %v2374 = vlaneseq
        %v2375 = vshrl.u32 %v2374, 7
        %v2376 = vsub.s32 0, %v2375
        %v2377 = vrot.slane %v2338, %v2376
        %v2379 = vadd.f32 %v2371, %v2377
        %v2380 = vadd.f32 %v2372, %v2377
        %2381 = vst.msk [vmem:[#allocation8] sm:$0xff] %vm863, %v2379
        %2382 = vst.msk [vmem:[#allocation8 + $0x8] sm:$0xff] %vm863, %v2380
        // Predicated region
        $region105: #{tpu_custom_call.1} parent=87 // pred_check
          %p2383 = pneg %p483
        $region106: #{tpu_custom_call.1} parent=87 // pred_check_branch
          %2385 = sbr.rel (%p2383) target = $region108
        $region107: #{tpu_custom_call.1} parent=87 // pred_region
          %s2387 = ssub.s32 256, 256
          %2388 = vsyncadd [#allocation4], %s2387
          %s2389 = sshll.u32 [#allocation8], 4
          %s2390 = int_to_ptr.vmem [resolvable:$true] %s2389
          %2395 = dma.vmem_to_hbm [thread:$0]  %s2390, 256, %s17, [#allocation4], 128, 128, 8
        $region108: #{tpu_custom_call.1} parent=87 // pred_fallthru
          _
        // Predicated region
        $region109: #{tpu_custom_call.1} parent=87 // pred_check
          %p2396 = pneg %p483
        $region110: #{tpu_custom_call.1} parent=87 // pred_check_branch
          %2398 = sbr.rel (%p2396) target = $region112
        $region111: #{tpu_custom_call.1} parent=87 // pred_region
          %2399 = dma.done [#allocation4], 256
        $region112: #{tpu_custom_call.1} parent=87 // pred_fallthru
          _
      $region88: #{tpu_custom_call.1} parent=5 // pred_fallthru
        _
      %p2400 = scmp.le.s32.totalorder 2, %s28
      // Predicated region
      $region113: #{tpu_custom_call.1} parent=5 // pred_check
        %p2401 = pneg %p2400
      $region114: #{tpu_custom_call.1} parent=5 // pred_check_branch
        %2403 = sbr.rel (%p2401) target = $region116
      $region115: #{tpu_custom_call.1} parent=5 // pred_region
        %s2404 = ssub.s32 %s28, 2
      $region116: #{tpu_custom_call.1} parent=5 // pred_fallthru
        _
    $region6: #{tpu_custom_call.1} parent=1 // loop_footer
      %s32 = sadd.s32 1, %s28
    $region7: #{tpu_custom_call.1} parent=1 // loop_footer_branch
      %27 = sbr.rel target = $region3
    $region8: #{tpu_custom_call.1} parent=1 // loop_exit
      _
    %2405 = vsyncpa [#allocation3], 1
    %s2406 = scalar_lea.sflag [#allocation3], 1
    %2407 = vsyncpa %s2406, 1
    %2408 = vsyncpa [#allocation6], 1
    %s2409 = scalar_lea.sflag [#allocation6], 1
    %2410 = vsyncpa %s2409, 1
    %2411 = vsyncpa [#allocation4], 1
    %s2412 = scalar_lea.sflag [#allocation4], 1
    %2413 = vsyncpa %s2412, 1

</llo_original>
